<compile_context>
chip_gen: v7x
topology: tpu7x:2x2x1
jax: 0.10.0
libtpu: 0.0.40
codegen_flags: <defaults>
</compile_context>

<pallas_src>
import functools

import numpy as np
import jax
import jax.numpy as jnp
from jax.experimental import pallas as pl
from jax.experimental.pallas import tpu as pltpu

LN_EPS = 1e-6


def _layernorm(x, gamma, beta):
    # MCAN-style LayerNorm: unbiased std, eps added to std (not variance).
    h = x.shape[-1]
    mean = jnp.mean(x, axis=-1, keepdims=True)
    d = x - mean
    var = jnp.sum(d * d, axis=-1, keepdims=True) / (h - 1)
    inv = pl.reciprocal(jnp.sqrt(var) + LN_EPS, approx=True)   # EUP path
    return gamma * d * inv + beta


def _make_kernel(using_ff_residual: bool):
    def kernel(y_ref, css_ref, chsh_ref,
               g1_ref, be1_ref,
               w1_ref, bw1_ref, w2_ref, bw2_ref,
               g2_ref, be2_ref,
               o_ref):
        Bt, S, H = y_ref.shape
        rows = Bt * S

        y3 = y_ref[...]                               # (Bt, S, H) f32
        y_b16 = y3.astype(jnp.bfloat16)

        # ---- seq-dim DFT first: ONE MXU push over the whole batch tile ----
        #   Y = [y_0 | y_1 | ... ] laid out (S, Bt*H);  [U ; V] = [C_S ; S_S] @ Y
        y_cols = jnp.concatenate([y_b16[b] for b in range(Bt)], axis=-1)  # (S, Bt*H)
        uv = jnp.dot(css_ref[...], y_cols,
                     preferred_element_type=jnp.float32)                 # (2S, Bt*H) f32
        u = uv[:S]
        v = uv[S:]

        # ---- hidden-dim DFT second; minus folded into [C_H ; -S_H] ----
        # Re(FFT2) = U @ C_H - V @ S_H = [U | V] @ [C_H ; -S_H]; rows back in (b,s)
        # order so the residual/LN/FFN/output need no further reordering.
        x2 = jnp.concatenate(
            [jnp.concatenate([u[:, b * H:(b + 1) * H],
                              v[:, b * H:(b + 1) * H]], axis=-1)
             for b in range(Bt)], axis=0).astype(jnp.bfloat16)           # (rows, 2H)
        fn2 = jnp.dot(x2, chsh_ref[...],
                      preferred_element_type=jnp.float32)                # (rows, H) f32

        # ---- residual + LayerNorm1 ----
        x = y3.reshape(rows, H) + fn2
        z = _layernorm(x, g1_ref[...], be1_ref[...])

        if using_ff_residual:
            # ---- FourierFFN: Linear -> ReLU -> Linear (dropout = identity) ----
            # TODO(synk): for production FF (>=2048) tile this over FF chunks to
            # bound VMEM residency on v7x's 64 MiB parts.
            h = jnp.dot(z.astype(jnp.bfloat16), w1_ref[...],
                        preferred_element_type=jnp.float32) + bw1_ref[...]
            h = jnp.maximum(h, 0.0)
            f = jnp.dot(h.astype(jnp.bfloat16), w2_ref[...],
                        preferred_element_type=jnp.float32) + bw2_ref[...]
            # ---- residual + LayerNorm2 ----
            z = _layernorm(z + f, g2_ref[...], be2_ref[...])

        o_ref[...] = z.reshape(Bt, S, H).astype(o_ref.dtype)

    return kernel


def dft_matrices(n, dtype=jnp.bfloat16):
    # Exact integer (j*k) mod n on host (numpy int64), then f64 trig -> requested dtype.
    k = np.arange(n, dtype=np.int64)
    jk = np.mod(np.outer(k, k), n).astype(np.float64)
    ang = 2.0 * np.pi * jk / float(n)
    return jnp.asarray(np.cos(ang), dtype), jnp.asarray(np.sin(ang), dtype)


@functools.lru_cache(maxsize=None)
def _vmem_capacity_bytes():
    try:
        return int(pltpu.get_tpu_info().vmem_capacity_bytes)
    except Exception:
        return 64 << 20            # conservative default (v7x-sized)


def _pick_batch_tile(B, S, H, FF, vmem_cap):
    """Largest divisor of B that (a) leaves >=2 grid steps (v7x has 2 TCs),
    (b) keeps the unrolled per-batch concat short, and (c) keeps the f32
    intermediate slab inside a VMEM-derived budget."""
    max_unroll = 8
    rows_cap = 512 if vmem_cap <= (64 << 20) else 1024
    slab_cap = vmem_cap // 8
    best = 1
    for bt in range(1, B + 1):
        if B % bt:
            continue
        if B >= 2 and bt > B // 2:        # keep >= 2 grid steps for 2-TC chips
            continue
        rows = bt * S
        if bt <= max_unroll and rows <= rows_cap and rows * max(H, FF) * 4 <= slab_cap:
            best = bt
    return best


def _fsf_impl(y, params, using_ff_residual, use_buffered):
    B, S, H = y.shape
    FF = params["w1"].shape[1]
    vmem_cap = _vmem_capacity_bytes()
    Bt = _pick_batch_tile(B, S, H, FF, vmem_cap)

    # bf16 MXU operands (f32 accumulation happens in-kernel).
    c_h, s_h = dft_matrices(H, jnp.bfloat16)
    c_s, s_s = dft_matrices(S, jnp.bfloat16)
    css = jnp.concatenate([c_s, s_s], axis=0)       # (2S, S):  [C_S ; S_S]
    chsh = jnp.concatenate([c_h, -s_h], axis=0)     # (2H, H):  [C_H ; -S_H]
    w1 = params["w1"].astype(jnp.bfloat16)
    w2 = params["w2"].astype(jnp.bfloat16)

    def const_spec(shape):
        n = len(shape)
        idx = lambda i, n=n: (0,) * n               # grid-invariant
        if use_buffered:
            return pl.BlockSpec(shape, idx, pipeline_mode=pl.Buffered(1))
        return pl.BlockSpec(shape, idx)

    in_specs = [
        pl.BlockSpec((Bt, S, H), lambda i: (i, 0, 0)),   # y
        const_spec((2 * S, S)),                          # [C_S ; S_S]
        const_spec((2 * H, H)),                          # [C_H ; -S_H]
        const_spec((1, H)), const_spec((1, H)),          # norm1 gamma, beta
        const_spec((H, FF)), const_spec((1, FF)),        # ffn W1 (bf16), b1
        const_spec((FF, H)), const_spec((1, H)),         # ffn W2 (bf16), b2
        const_spec((1, H)), const_spec((1, H)),          # norm2 gamma, beta
    ]
    out_specs = pl.BlockSpec((Bt, S, H), lambda i: (i, 0, 0))

    # VMEM budget: constants (single- or double-buffered), double-buffered y/out
    # tiles, and a generous bound on the f32 intermediates; clamped to a
    # hardware-derived ceiling (~3/4 of physical VMEM).
    const_arrays = (css, chsh, params["g1"], params["b1"], w1, params["bw1"],
                    w2, params["bw2"], params["g2"], params["b2"])
    const_bytes = sum(int(np.prod(a.shape)) * jnp.dtype(a.dtype).itemsize
                      for a in const_arrays)
    const_bytes *= (1 if use_buffered else 2)
    rows = Bt * S
    act_bytes = rows * (16 * H + 4 * FF) * 4
    io_bytes = 2 * 2 * rows * H * 4
    est = const_bytes + io_bytes + act_bytes
    vmem_limit = int(min(max(2 * est + (4 << 20), 16 << 20), (vmem_cap * 3) // 4))

    return pl.pallas_call(
        _make_kernel(using_ff_residual),
        grid=(B // Bt,),
        in_specs=in_specs,
        out_specs=out_specs,
        out_shape=jax.ShapeDtypeStruct((B, S, H), jnp.float32),
        compiler_params=pltpu.CompilerParams(
            dimension_semantics=("parallel",),
            vmem_limit_bytes=vmem_limit),
    )(y, css, chsh,
      params["g1"], params["b1"],
      w1, params["bw1"], w2, params["bw2"],
      params["g2"], params["b2"])


_fsf_jit = jax.jit(_fsf_impl, static_argnames=("using_ff_residual", "use_buffered"))
_BUFFERED_OK = None


def fourier_self_fusion(y, params, using_ff_residual=True):
    """y: float32 [B, S, H]."""
    global _BUFFERED_OK
    if _BUFFERED_OK is None:
        try:
            out = _fsf_jit(y, params, using_ff_residual, True)
            jax.block_until_ready(out)
            _BUFFERED_OK = True
            return out
        except Exception:
            # Installed Pallas rejects pipeline_mode/Buffered(1): fall back to
            # default double-buffered constants (correctness unchanged).
            _BUFFERED_OK = False
    return _fsf_jit(y, params, using_ff_residual, _BUFFERED_OK)


def init_params(key, hidden, ff_size):
    k1, k2 = jax.random.split(key)
    return {
        # LayerNorm1
        "g1": jnp.ones((1, hidden), jnp.float32),
        "b1": jnp.zeros((1, hidden), jnp.float32),
        # FourierFFN (Linear -> ReLU -> Linear)
        "w1": (jax.random.normal(k1, (hidden, ff_size), jnp.float32) * 0.02),
        "bw1": jnp.zeros((1, ff_size), jnp.float32),
        "w2": (jax.random.normal(k2, (ff_size, hidden), jnp.float32) * 0.02),
        "bw2": jnp.zeros((1, hidden), jnp.float32),
        # LayerNorm2
        "g2": jnp.ones((1, hidden), jnp.float32),
        "b2": jnp.zeros((1, hidden), jnp.float32),
    }


def _ln_ref(x, g, b):
    mean = jnp.mean(x, -1, keepdims=True)
    var = jnp.sum((x - mean) ** 2, -1, keepdims=True) / (x.shape[-1] - 1)
    return g * (x - mean) / (jnp.sqrt(var) + LN_EPS) + b


def _reference_fft(y, params, using_ff_residual=True):
    """Exact float32 pure-JAX reference using jnp.fft (semantic check)."""
    fn = jnp.real(jnp.fft.fft(jnp.fft.fft(y, axis=-1), axis=-2))
    z = _ln_ref(y + fn, params["g1"], params["b1"])
    if using_ff_residual:
        h = jnp.maximum(z @ params["w1"] + params["bw1"], 0.0)
        f = h @ params["w2"] + params["bw2"]
        z = _ln_ref(z + f, params["g2"], params["b2"])
    return z


def _reference_matched(y, params, using_ff_residual=True):
    """Pure-JAX reference mirroring the kernel's bf16 MXU inputs and its
    seq-first DFT factorization (tight check)."""
    B, S, H = y.shape
    c_h, s_h = dft_matrices(H, jnp.bfloat16)
    c_s, s_s = dft_matrices(S, jnp.bfloat16)
    yb = y.astype(jnp.bfloat16)
    u = jnp.einsum('sk,bkh->bsh', c_s, yb, preferred_element_type=jnp.float32)
    v = jnp.einsum('sk,bkh->bsh', s_s, yb, preferred_element_type=jnp.float32)
    xx = jnp.concatenate([u, v], axis=-1).astype(jnp.bfloat16)
    chsh = jnp.concatenate([c_h, -s_h], axis=0)
    fn = jnp.einsum('bsk,kh->bsh', xx, chsh, preferred_element_type=jnp.float32)
    z = _ln_ref(y + fn, params["g1"], params["b1"])
    if using_ff_residual:
        h = jnp.maximum(
            jnp.einsum('bsh,hf->bsf', z.astype(jnp.bfloat16),
                       params["w1"].astype(jnp.bfloat16),
                       preferred_element_type=jnp.float32) + params["bw1"], 0.0)
        f = jnp.einsum('bsf,fh->bsh', h.astype(jnp.bfloat16),
                       params["w2"].astype(jnp.bfloat16),
                       preferred_element_type=jnp.float32) + params["bw2"]
        z = _ln_ref(z + f, params["g2"], params["b2"])
    return z


if __name__ == "__main__":
    B, S, H, FF = 2, 8, 32, 64  # HIDDEN_SIZE=32, FF_SIZE=64 for the small example

    key = jax.random.PRNGKey(0)
    ky, kp = jax.random.split(key)
    y = jax.random.normal(ky, (B, S, H), jnp.float32)
    params = init_params(kp, H, FF)

    out = jax.block_until_ready(fourier_self_fusion(y, params, using_ff_residual=True))
    assert out.shape == (B, S, H)

    # Tight check vs a reference mirroring the kernel's bf16 MXU inputs.
    ref_m = _reference_matched(y, params, using_ff_residual=True)
    err_m = float(jnp.max(jnp.abs(out - ref_m)))
    # Semantic check vs the exact float32 FFT reference (bf16 matmul inputs => looser tol).
    ref_f = _reference_fft(y, params, using_ff_residual=True)
    err_f = float(jnp.max(jnp.abs(out - ref_f)))

    assert err_m < 5e-2, f"mismatch vs bf16-matched reference: {err_m}"
    assert err_f < 1.5e-1, f"mismatch vs float32 FFT reference: {err_f}"

    print("KERNEL_OK")
</pallas_src>

<mosaic_0001>
module attributes {stable_mosaic.version = 11 : i64} {
  func.func @kernel(%arg0: i32, %arg1: memref<1x8x32xf32, #tpu.memory_space<vmem>>, %arg2: memref<16x8xbf16, #tpu.memory_space<vmem>>, %arg3: memref<64x32xbf16, #tpu.memory_space<vmem>>, %arg4: memref<1x32xf32, #tpu.memory_space<vmem>>, %arg5: memref<1x32xf32, #tpu.memory_space<vmem>>, %arg6: memref<32x64xbf16, #tpu.memory_space<vmem>>, %arg7: memref<1x64xf32, #tpu.memory_space<vmem>>, %arg8: memref<64x32xbf16, #tpu.memory_space<vmem>>, %arg9: memref<1x32xf32, #tpu.memory_space<vmem>>, %arg10: memref<1x32xf32, #tpu.memory_space<vmem>>, %arg11: memref<1x32xf32, #tpu.memory_space<vmem>>, %arg12: memref<1x8x32xf32, #tpu.memory_space<vmem>>) attributes {dimension_semantics = [#tpu.dimension_semantics<parallel>], iteration_bounds = array<i64: 2>, scalar_prefetch = 0 : i64, scratch_operands = 0 : i64, tpu.core_type = #tpu.core_type<tc>, window_params = [{transform_indices = @transform_0, window_bounds = array<i64: 1, 8, 32>}, {pipeline_mode = #tpu.pipeline_mode<synchronous>, transform_indices = @transform_1, window_bounds = array<i64: 16, 8>}, {pipeline_mode = #tpu.pipeline_mode<synchronous>, transform_indices = @transform_2, window_bounds = array<i64: 64, 32>}, {pipeline_mode = #tpu.pipeline_mode<synchronous>, transform_indices = @transform_3, window_bounds = array<i64: 1, 32>}, {pipeline_mode = #tpu.pipeline_mode<synchronous>, transform_indices = @transform_4, window_bounds = array<i64: 1, 32>}, {pipeline_mode = #tpu.pipeline_mode<synchronous>, transform_indices = @transform_5, window_bounds = array<i64: 32, 64>}, {pipeline_mode = #tpu.pipeline_mode<synchronous>, transform_indices = @transform_6, window_bounds = array<i64: 1, 64>}, {pipeline_mode = #tpu.pipeline_mode<synchronous>, transform_indices = @transform_7, window_bounds = array<i64: 64, 32>}, {pipeline_mode = #tpu.pipeline_mode<synchronous>, transform_indices = @transform_8, window_bounds = array<i64: 1, 32>}, {pipeline_mode = #tpu.pipeline_mode<synchronous>, transform_indices = @transform_9, window_bounds = array<i64: 1, 32>}, {pipeline_mode = #tpu.pipeline_mode<synchronous>, transform_indices = @transform_10, window_bounds = array<i64: 1, 32>}, {transform_indices = @transform_11, window_bounds = array<i64: 1, 8, 32>}]} {
    %c0 = arith.constant 0 : index
    %c0_0 = arith.constant 0 : index
    %c0_1 = arith.constant 0 : index
    %0 = vector.load %arg1[%c0, %c0_0, %c0_1] : memref<1x8x32xf32, #tpu.memory_space<vmem>>, vector<1x8x32xf32>
    %1 = arith.truncf %0 : vector<1x8x32xf32> to vector<1x8x32xbf16>
    %2 = vector.shape_cast %1 : vector<1x8x32xbf16> to vector<8x32xbf16>
    %c0_2 = arith.constant 0 : index
    %c0_3 = arith.constant 0 : index
    %3 = vector.load %arg2[%c0_2, %c0_3] : memref<16x8xbf16, #tpu.memory_space<vmem>>, vector<16x8xbf16>
    %cst = arith.constant dense<0.000000e+00> : vector<16x32xf32>
    %4 = tpu.matmul %3, %2, %cst {dimension_numbers = #tpu.dot_dimension_numbers<[1], [0], [0], [1], [0, 0, 1, 1], [], []>} : vector<16x8xbf16>, vector<8x32xbf16>, vector<16x32xf32> -> vector<16x32xf32>
    %5 = vector.extract_strided_slice %4 {offsets = [0, 0], sizes = [8, 32], strides = [1, 1]} : vector<16x32xf32> to vector<8x32xf32>
    %6 = vector.extract_strided_slice %4 {offsets = [8, 0], sizes = [8, 32], strides = [1, 1]} : vector<16x32xf32> to vector<8x32xf32>
    %7 = tpu.concatenate %5, %6 in 1 : vector<8x32xf32>, vector<8x32xf32> -> vector<8x64xf32>
    %8 = arith.truncf %7 : vector<8x64xf32> to vector<8x64xbf16>
    %c0_4 = arith.constant 0 : index
    %c0_5 = arith.constant 0 : index
    %9 = vector.load %arg3[%c0_4, %c0_5] : memref<64x32xbf16, #tpu.memory_space<vmem>>, vector<64x32xbf16>
    %cst_6 = arith.constant dense<0.000000e+00> : vector<8x32xf32>
    %10 = tpu.matmul %8, %9, %cst_6 {dimension_numbers = #tpu.dot_dimension_numbers<[1], [0], [0], [1], [0, 0, 1, 1], [], []>} : vector<8x64xbf16>, vector<64x32xbf16>, vector<8x32xf32> -> vector<8x32xf32>
    %11 = vector.shape_cast %0 : vector<1x8x32xf32> to vector<8x32xf32>
    %12 = arith.addf %11, %10 : vector<8x32xf32>
    %c0_7 = arith.constant 0 : index
    %c0_8 = arith.constant 0 : index
    %13 = vector.load %arg4[%c0_7, %c0_8] : memref<1x32xf32, #tpu.memory_space<vmem>>, vector<1x32xf32>
    %c0_9 = arith.constant 0 : index
    %c0_10 = arith.constant 0 : index
    %14 = vector.load %arg5[%c0_9, %c0_10] : memref<1x32xf32, #tpu.memory_space<vmem>>, vector<1x32xf32>
    %cst_11 = arith.constant dense<0.000000e+00> : vector<8xf32>
    %15 = vector.multi_reduction <add>, %12, %cst_11 [1] : vector<8x32xf32> to vector<8xf32>
    %16 = vector.shape_cast %15 : vector<8xf32> to vector<8x1xf32>
    %cst_12 = arith.constant 3.200000e+01 : f32
    %17 = vector.broadcast %cst_12 : f32 to vector<8x1xf32>
    %18 = arith.divf %16, %17 : vector<8x1xf32>
    %19 = vector.broadcast %18 : vector<8x1xf32> to vector<8x32xf32>
    %20 = arith.subf %12, %19 : vector<8x32xf32>
    %21 = arith.mulf %20, %20 : vector<8x32xf32>
    %cst_13 = arith.constant dense<0.000000e+00> : vector<8xf32>
    %22 = vector.multi_reduction <add>, %21, %cst_13 [1] : vector<8x32xf32> to vector<8xf32>
    %23 = vector.shape_cast %22 : vector<8xf32> to vector<8x1xf32>
    %cst_14 = arith.constant 3.100000e+01 : f32
    %24 = vector.broadcast %cst_14 : f32 to vector<8x1xf32>
    %25 = arith.divf %23, %24 : vector<8x1xf32>
    %26 = math.sqrt %25 : vector<8x1xf32>
    %cst_15 = arith.constant 9.99999997E-7 : f32
    %27 = vector.broadcast %cst_15 : f32 to vector<8x1xf32>
    %28 = arith.addf %26, %27 : vector<8x1xf32>
    %29 = tpu.reciprocal %28 {approx = true} : vector<8x1xf32> -> vector<8x1xf32>
    %30 = vector.broadcast %13 : vector<1x32xf32> to vector<8x32xf32>
    %31 = arith.mulf %30, %20 : vector<8x32xf32>
    %32 = vector.broadcast %29 : vector<8x1xf32> to vector<8x32xf32>
    %33 = arith.mulf %31, %32 : vector<8x32xf32>
    %34 = vector.broadcast %14 : vector<1x32xf32> to vector<8x32xf32>
    %35 = arith.addf %33, %34 : vector<8x32xf32>
    %36 = arith.truncf %35 : vector<8x32xf32> to vector<8x32xbf16>
    %c0_16 = arith.constant 0 : index
    %c0_17 = arith.constant 0 : index
    %37 = vector.load %arg6[%c0_16, %c0_17] : memref<32x64xbf16, #tpu.memory_space<vmem>>, vector<32x64xbf16>
    %cst_18 = arith.constant dense<0.000000e+00> : vector<8x64xf32>
    %38 = tpu.matmul %36, %37, %cst_18 {dimension_numbers = #tpu.dot_dimension_numbers<[1], [0], [0], [1], [0, 0, 1, 1], [], []>} : vector<8x32xbf16>, vector<32x64xbf16>, vector<8x64xf32> -> vector<8x64xf32>
    %c0_19 = arith.constant 0 : index
    %c0_20 = arith.constant 0 : index
    %39 = vector.load %arg7[%c0_19, %c0_20] : memref<1x64xf32, #tpu.memory_space<vmem>>, vector<1x64xf32>
    %40 = vector.broadcast %39 : vector<1x64xf32> to vector<8x64xf32>
    %41 = arith.addf %38, %40 : vector<8x64xf32>
    %cst_21 = arith.constant 0.000000e+00 : f32
    %42 = vector.broadcast %cst_21 : f32 to vector<8x64xf32>
    %43 = arith.maximumf %41, %42 : vector<8x64xf32>
    %44 = arith.truncf %43 : vector<8x64xf32> to vector<8x64xbf16>
    %c0_22 = arith.constant 0 : index
    %c0_23 = arith.constant 0 : index
    %45 = vector.load %arg8[%c0_22, %c0_23] : memref<64x32xbf16, #tpu.memory_space<vmem>>, vector<64x32xbf16>
    %cst_24 = arith.constant dense<0.000000e+00> : vector<8x32xf32>
    %46 = tpu.matmul %44, %45, %cst_24 {dimension_numbers = #tpu.dot_dimension_numbers<[1], [0], [0], [1], [0, 0, 1, 1], [], []>} : vector<8x64xbf16>, vector<64x32xbf16>, vector<8x32xf32> -> vector<8x32xf32>
    %c0_25 = arith.constant 0 : index
    %c0_26 = arith.constant 0 : index
    %47 = vector.load %arg9[%c0_25, %c0_26] : memref<1x32xf32, #tpu.memory_space<vmem>>, vector<1x32xf32>
    %48 = vector.broadcast %47 : vector<1x32xf32> to vector<8x32xf32>
    %49 = arith.addf %46, %48 : vector<8x32xf32>
    %50 = arith.addf %35, %49 : vector<8x32xf32>
    %c0_27 = arith.constant 0 : index
    %c0_28 = arith.constant 0 : index
    %51 = vector.load %arg10[%c0_27, %c0_28] : memref<1x32xf32, #tpu.memory_space<vmem>>, vector<1x32xf32>
    %c0_29 = arith.constant 0 : index
    %c0_30 = arith.constant 0 : index
    %52 = vector.load %arg11[%c0_29, %c0_30] : memref<1x32xf32, #tpu.memory_space<vmem>>, vector<1x32xf32>
    %cst_31 = arith.constant dense<0.000000e+00> : vector<8xf32>
    %53 = vector.multi_reduction <add>, %50, %cst_31 [1] : vector<8x32xf32> to vector<8xf32>
    %54 = vector.shape_cast %53 : vector<8xf32> to vector<8x1xf32>
    %cst_32 = arith.constant 3.200000e+01 : f32
    %55 = vector.broadcast %cst_32 : f32 to vector<8x1xf32>
    %56 = arith.divf %54, %55 : vector<8x1xf32>
    %57 = vector.broadcast %56 : vector<8x1xf32> to vector<8x32xf32>
    %58 = arith.subf %50, %57 : vector<8x32xf32>
    %59 = arith.mulf %58, %58 : vector<8x32xf32>
    %cst_33 = arith.constant dense<0.000000e+00> : vector<8xf32>
    %60 = vector.multi_reduction <add>, %59, %cst_33 [1] : vector<8x32xf32> to vector<8xf32>
    %61 = vector.shape_cast %60 : vector<8xf32> to vector<8x1xf32>
    %cst_34 = arith.constant 3.100000e+01 : f32
    %62 = vector.broadcast %cst_34 : f32 to vector<8x1xf32>
    %63 = arith.divf %61, %62 : vector<8x1xf32>
    %64 = math.sqrt %63 : vector<8x1xf32>
    %cst_35 = arith.constant 9.99999997E-7 : f32
    %65 = vector.broadcast %cst_35 : f32 to vector<8x1xf32>
    %66 = arith.addf %64, %65 : vector<8x1xf32>
    %67 = tpu.reciprocal %66 {approx = true} : vector<8x1xf32> -> vector<8x1xf32>
    %68 = vector.broadcast %51 : vector<1x32xf32> to vector<8x32xf32>
    %69 = arith.mulf %68, %58 : vector<8x32xf32>
    %70 = vector.broadcast %67 : vector<8x1xf32> to vector<8x32xf32>
    %71 = arith.mulf %69, %70 : vector<8x32xf32>
    %72 = vector.broadcast %52 : vector<1x32xf32> to vector<8x32xf32>
    %73 = arith.addf %71, %72 : vector<8x32xf32>
    %74 = vector.shape_cast %73 : vector<8x32xf32> to vector<1x8x32xf32>
    %c0_36 = arith.constant 0 : index
    %c0_37 = arith.constant 0 : index
    %c0_38 = arith.constant 0 : index
    %75 = vector.load %arg12[%c0_36, %c0_37, %c0_38] : memref<1x8x32xf32, #tpu.memory_space<vmem>>, vector<1x8x32xf32>
    tpu.vector_store %arg12[%c0_36, %c0_37, %c0_38], %74 {strides = array<i32>} : memref<1x8x32xf32, #tpu.memory_space<vmem>>, vector<1x8x32xf32>,
    return
  }
  func.func @transform_0(%arg0: i32) -> (i32, i32, i32) {
    %c0_i32 = arith.constant 0 : i32
    %c0_i32_0 = arith.constant 0 : i32
    %c0_i32_1 = arith.constant 0 : i32
    return %arg0, %c0_i32, %c0_i32_0 : i32, i32, i32
  }
  func.func @transform_1(%arg0: i32) -> (i32, i32) {
    %c0_i32 = arith.constant 0 : i32
    %c0_i32_0 = arith.constant 0 : i32
    %c0_i32_1 = arith.constant 0 : i32
    return %c0_i32, %c0_i32_0 : i32, i32
  }
  func.func @transform_2(%arg0: i32) -> (i32, i32) {
    %c0_i32 = arith.constant 0 : i32
    %c0_i32_0 = arith.constant 0 : i32
    %c0_i32_1 = arith.constant 0 : i32
    return %c0_i32, %c0_i32_0 : i32, i32
  }
  func.func @transform_3(%arg0: i32) -> (i32, i32) {
    %c0_i32 = arith.constant 0 : i32
    %c0_i32_0 = arith.constant 0 : i32
    %c0_i32_1 = arith.constant 0 : i32
    return %c0_i32, %c0_i32_0 : i32, i32
  }
  func.func @transform_4(%arg0: i32) -> (i32, i32) {
    %c0_i32 = arith.constant 0 : i32
    %c0_i32_0 = arith.constant 0 : i32
    %c0_i32_1 = arith.constant 0 : i32
    return %c0_i32, %c0_i32_0 : i32, i32
  }
  func.func @transform_5(%arg0: i32) -> (i32, i32) {
    %c0_i32 = arith.constant 0 : i32
    %c0_i32_0 = arith.constant 0 : i32
    %c0_i32_1 = arith.constant 0 : i32
    return %c0_i32, %c0_i32_0 : i32, i32
  }
  func.func @transform_6(%arg0: i32) -> (i32, i32) {
    %c0_i32 = arith.constant 0 : i32
    %c0_i32_0 = arith.constant 0 : i32
    %c0_i32_1 = arith.constant 0 : i32
    return %c0_i32, %c0_i32_0 : i32, i32
  }
  func.func @transform_7(%arg0: i32) -> (i32, i32) {
    %c0_i32 = arith.constant 0 : i32
    %c0_i32_0 = arith.constant 0 : i32
    %c0_i32_1 = arith.constant 0 : i32
    return %c0_i32, %c0_i32_0 : i32, i32
  }
  func.func @transform_8(%arg0: i32) -> (i32, i32) {
    %c0_i32 = arith.constant 0 : i32
    %c0_i32_0 = arith.constant 0 : i32
    %c0_i32_1 = arith.constant 0 : i32
    return %c0_i32, %c0_i32_0 : i32, i32
  }
  func.func @transform_9(%arg0: i32) -> (i32, i32) {
    %c0_i32 = arith.constant 0 : i32
    %c0_i32_0 = arith.constant 0 : i32
    %c0_i32_1 = arith.constant 0 : i32
    return %c0_i32, %c0_i32_0 : i32, i32
  }
  func.func @transform_10(%arg0: i32) -> (i32, i32) {
    %c0_i32 = arith.constant 0 : i32
    %c0_i32_0 = arith.constant 0 : i32
    %c0_i32_1 = arith.constant 0 : i32
    return %c0_i32, %c0_i32_0 : i32, i32
  }
  func.func @transform_11(%arg0: i32) -> (i32, i32, i32) {
    %c0_i32 = arith.constant 0 : i32
    %c0_i32_0 = arith.constant 0 : i32
    %c0_i32_1 = arith.constant 0 : i32
    return %arg0, %c0_i32, %c0_i32_0 : i32, i32, i32
  }
}

module attributes {stable_mosaic.version = 11 : i64} {
  func.func @kernel(%arg0: i32, %arg1: memref<1x8x32xf32, #tpu.memory_space<vmem>>, %arg2: memref<16x8xbf16, #tpu.memory_space<vmem>>, %arg3: memref<64x32xbf16, #tpu.memory_space<vmem>>, %arg4: memref<1x32xf32, #tpu.memory_space<vmem>>, %arg5: memref<1x32xf32, #tpu.memory_space<vmem>>, %arg6: memref<32x64xbf16, #tpu.memory_space<vmem>>, %arg7: memref<1x64xf32, #tpu.memory_space<vmem>>, %arg8: memref<64x32xbf16, #tpu.memory_space<vmem>>, %arg9: memref<1x32xf32, #tpu.memory_space<vmem>>, %arg10: memref<1x32xf32, #tpu.memory_space<vmem>>, %arg11: memref<1x32xf32, #tpu.memory_space<vmem>>, %arg12: memref<1x8x32xf32, #tpu.memory_space<vmem>>) attributes {dimension_semantics = [#tpu.dimension_semantics<parallel>], iteration_bounds = array<i64: 2>, scalar_prefetch = 0 : i64, scratch_operands = 0 : i64, tpu.core_type = #tpu.core_type<tc>, window_params = [{transform_indices = @transform_0, window_bounds = array<i64: 1, 8, 32>}, {pipeline_mode = #tpu.pipeline_mode<synchronous>, transform_indices = @transform_1, window_bounds = array<i64: 16, 8>}, {pipeline_mode = #tpu.pipeline_mode<synchronous>, transform_indices = @transform_2, window_bounds = array<i64: 64, 32>}, {pipeline_mode = #tpu.pipeline_mode<synchronous>, transform_indices = @transform_3, window_bounds = array<i64: 1, 32>}, {pipeline_mode = #tpu.pipeline_mode<synchronous>, transform_indices = @transform_4, window_bounds = array<i64: 1, 32>}, {pipeline_mode = #tpu.pipeline_mode<synchronous>, transform_indices = @transform_5, window_bounds = array<i64: 32, 64>}, {pipeline_mode = #tpu.pipeline_mode<synchronous>, transform_indices = @transform_6, window_bounds = array<i64: 1, 64>}, {pipeline_mode = #tpu.pipeline_mode<synchronous>, transform_indices = @transform_7, window_bounds = array<i64: 64, 32>}, {pipeline_mode = #tpu.pipeline_mode<synchronous>, transform_indices = @transform_8, window_bounds = array<i64: 1, 32>}, {pipeline_mode = #tpu.pipeline_mode<synchronous>, transform_indices = @transform_9, window_bounds = array<i64: 1, 32>}, {pipeline_mode = #tpu.pipeline_mode<synchronous>, transform_indices = @transform_10, window_bounds = array<i64: 1, 32>}, {transform_indices = @transform_11, window_bounds = array<i64: 1, 8, 32>}]} {
    %c0 = arith.constant 0 : index
    %c0_0 = arith.constant 0 : index
    %c0_1 = arith.constant 0 : index
    %0 = vector.load %arg1[%c0, %c0_0, %c0_1] : memref<1x8x32xf32, #tpu.memory_space<vmem>>, vector<1x8x32xf32>
    %1 = arith.truncf %0 : vector<1x8x32xf32> to vector<1x8x32xbf16>
    %2 = vector.shape_cast %1 : vector<1x8x32xbf16> to vector<8x32xbf16>
    %c0_2 = arith.constant 0 : index
    %c0_3 = arith.constant 0 : index
    %3 = vector.load %arg2[%c0_2, %c0_3] : memref<16x8xbf16, #tpu.memory_space<vmem>>, vector<16x8xbf16>
    %cst = arith.constant dense<0.000000e+00> : vector<16x32xf32>
    %4 = tpu.matmul %3, %2, %cst {dimension_numbers = #tpu.dot_dimension_numbers<[1], [0], [0], [1], [0, 0, 1, 1], [], []>} : vector<16x8xbf16>, vector<8x32xbf16>, vector<16x32xf32> -> vector<16x32xf32>
    %5 = vector.extract_strided_slice %4 {offsets = [0, 0], sizes = [8, 32], strides = [1, 1]} : vector<16x32xf32> to vector<8x32xf32>
    %6 = vector.extract_strided_slice %4 {offsets = [8, 0], sizes = [8, 32], strides = [1, 1]} : vector<16x32xf32> to vector<8x32xf32>
    %7 = tpu.concatenate %5, %6 in 1 : vector<8x32xf32>, vector<8x32xf32> -> vector<8x64xf32>
    %8 = arith.truncf %7 : vector<8x64xf32> to vector<8x64xbf16>
    %c0_4 = arith.constant 0 : index
    %c0_5 = arith.constant 0 : index
    %9 = vector.load %arg3[%c0_4, %c0_5] : memref<64x32xbf16, #tpu.memory_space<vmem>>, vector<64x32xbf16>
    %cst_6 = arith.constant dense<0.000000e+00> : vector<8x32xf32>
    %10 = tpu.matmul %8, %9, %cst_6 {dimension_numbers = #tpu.dot_dimension_numbers<[1], [0], [0], [1], [0, 0, 1, 1], [], []>} : vector<8x64xbf16>, vector<64x32xbf16>, vector<8x32xf32> -> vector<8x32xf32>
    %11 = vector.shape_cast %0 : vector<1x8x32xf32> to vector<8x32xf32>
    %12 = arith.addf %11, %10 : vector<8x32xf32>
    %c0_7 = arith.constant 0 : index
    %c0_8 = arith.constant 0 : index
    %13 = vector.load %arg4[%c0_7, %c0_8] : memref<1x32xf32, #tpu.memory_space<vmem>>, vector<1x32xf32>
    %c0_9 = arith.constant 0 : index
    %c0_10 = arith.constant 0 : index
    %14 = vector.load %arg5[%c0_9, %c0_10] : memref<1x32xf32, #tpu.memory_space<vmem>>, vector<1x32xf32>
    %cst_11 = arith.constant dense<0.000000e+00> : vector<8xf32>
    %15 = vector.multi_reduction <add>, %12, %cst_11 [1] : vector<8x32xf32> to vector<8xf32>
    %16 = vector.shape_cast %15 : vector<8xf32> to vector<8x1xf32>
    %cst_12 = arith.constant 3.200000e+01 : f32
    %17 = vector.broadcast %cst_12 : f32 to vector<8x1xf32>
    %18 = arith.divf %16, %17 : vector<8x1xf32>
    %19 = vector.broadcast %18 : vector<8x1xf32> to vector<8x32xf32>
    %20 = arith.subf %12, %19 : vector<8x32xf32>
    %21 = arith.mulf %20, %20 : vector<8x32xf32>
    %cst_13 = arith.constant dense<0.000000e+00> : vector<8xf32>
    %22 = vector.multi_reduction <add>, %21, %cst_13 [1] : vector<8x32xf32> to vector<8xf32>
    %23 = vector.shape_cast %22 : vector<8xf32> to vector<8x1xf32>
    %cst_14 = arith.constant 3.100000e+01 : f32
    %24 = vector.broadcast %cst_14 : f32 to vector<8x1xf32>
    %25 = arith.divf %23, %24 : vector<8x1xf32>
    %26 = math.sqrt %25 : vector<8x1xf32>
    %cst_15 = arith.constant 9.99999997E-7 : f32
    %27 = vector.broadcast %cst_15 : f32 to vector<8x1xf32>
    %28 = arith.addf %26, %27 : vector<8x1xf32>
    %29 = tpu.reciprocal %28 {approx = true} : vector<8x1xf32> -> vector<8x1xf32>
    %30 = vector.broadcast %13 : vector<1x32xf32> to vector<8x32xf32>
    %31 = arith.mulf %30, %20 : vector<8x32xf32>
    %32 = vector.broadcast %29 : vector<8x1xf32> to vector<8x32xf32>
    %33 = arith.mulf %31, %32 : vector<8x32xf32>
    %34 = vector.broadcast %14 : vector<1x32xf32> to vector<8x32xf32>
    %35 = arith.addf %33, %34 : vector<8x32xf32>
    %36 = arith.truncf %35 : vector<8x32xf32> to vector<8x32xbf16>
    %c0_16 = arith.constant 0 : index
    %c0_17 = arith.constant 0 : index
    %37 = vector.load %arg6[%c0_16, %c0_17] : memref<32x64xbf16, #tpu.memory_space<vmem>>, vector<32x64xbf16>
    %cst_18 = arith.constant dense<0.000000e+00> : vector<8x64xf32>
    %38 = tpu.matmul %36, %37, %cst_18 {dimension_numbers = #tpu.dot_dimension_numbers<[1], [0], [0], [1], [0, 0, 1, 1], [], []>} : vector<8x32xbf16>, vector<32x64xbf16>, vector<8x64xf32> -> vector<8x64xf32>
    %c0_19 = arith.constant 0 : index
    %c0_20 = arith.constant 0 : index
    %39 = vector.load %arg7[%c0_19, %c0_20] : memref<1x64xf32, #tpu.memory_space<vmem>>, vector<1x64xf32>
    %40 = vector.broadcast %39 : vector<1x64xf32> to vector<8x64xf32>
    %41 = arith.addf %38, %40 : vector<8x64xf32>
    %cst_21 = arith.constant 0.000000e+00 : f32
    %42 = vector.broadcast %cst_21 : f32 to vector<8x64xf32>
    %43 = arith.maximumf %41, %42 : vector<8x64xf32>
    %44 = arith.truncf %43 : vector<8x64xf32> to vector<8x64xbf16>
    %c0_22 = arith.constant 0 : index
    %c0_23 = arith.constant 0 : index
    %45 = vector.load %arg8[%c0_22, %c0_23] : memref<64x32xbf16, #tpu.memory_space<vmem>>, vector<64x32xbf16>
    %cst_24 = arith.constant dense<0.000000e+00> : vector<8x32xf32>
    %46 = tpu.matmul %44, %45, %cst_24 {dimension_numbers = #tpu.dot_dimension_numbers<[1], [0], [0], [1], [0, 0, 1, 1], [], []>} : vector<8x64xbf16>, vector<64x32xbf16>, vector<8x32xf32> -> vector<8x32xf32>
    %c0_25 = arith.constant 0 : index
    %c0_26 = arith.constant 0 : index
    %47 = vector.load %arg9[%c0_25, %c0_26] : memref<1x32xf32, #tpu.memory_space<vmem>>, vector<1x32xf32>
    %48 = vector.broadcast %47 : vector<1x32xf32> to vector<8x32xf32>
    %49 = arith.addf %46, %48 : vector<8x32xf32>
    %50 = arith.addf %35, %49 : vector<8x32xf32>
    %c0_27 = arith.constant 0 : index
    %c0_28 = arith.constant 0 : index
    %51 = vector.load %arg10[%c0_27, %c0_28] : memref<1x32xf32, #tpu.memory_space<vmem>>, vector<1x32xf32>
    %c0_29 = arith.constant 0 : index
    %c0_30 = arith.constant 0 : index
    %52 = vector.load %arg11[%c0_29, %c0_30] : memref<1x32xf32, #tpu.memory_space<vmem>>, vector<1x32xf32>
    %cst_31 = arith.constant dense<0.000000e+00> : vector<8xf32>
    %53 = vector.multi_reduction <add>, %50, %cst_31 [1] : vector<8x32xf32> to vector<8xf32>
    %54 = vector.shape_cast %53 : vector<8xf32> to vector<8x1xf32>
    %cst_32 = arith.constant 3.200000e+01 : f32
    %55 = vector.broadcast %cst_32 : f32 to vector<8x1xf32>
    %56 = arith.divf %54, %55 : vector<8x1xf32>
    %57 = vector.broadcast %56 : vector<8x1xf32> to vector<8x32xf32>
    %58 = arith.subf %50, %57 : vector<8x32xf32>
    %59 = arith.mulf %58, %58 : vector<8x32xf32>
    %cst_33 = arith.constant dense<0.000000e+00> : vector<8xf32>
    %60 = vector.multi_reduction <add>, %59, %cst_33 [1] : vector<8x32xf32> to vector<8xf32>
    %61 = vector.shape_cast %60 : vector<8xf32> to vector<8x1xf32>
    %cst_34 = arith.constant 3.100000e+01 : f32
    %62 = vector.broadcast %cst_34 : f32 to vector<8x1xf32>
    %63 = arith.divf %61, %62 : vector<8x1xf32>
    %64 = math.sqrt %63 : vector<8x1xf32>
    %cst_35 = arith.constant 9.99999997E-7 : f32
    %65 = vector.broadcast %cst_35 : f32 to vector<8x1xf32>
    %66 = arith.addf %64, %65 : vector<8x1xf32>
    %67 = tpu.reciprocal %66 {approx = true} : vector<8x1xf32> -> vector<8x1xf32>
    %68 = vector.broadcast %51 : vector<1x32xf32> to vector<8x32xf32>
    %69 = arith.mulf %68, %58 : vector<8x32xf32>
    %70 = vector.broadcast %67 : vector<8x1xf32> to vector<8x32xf32>
    %71 = arith.mulf %69, %70 : vector<8x32xf32>
    %72 = vector.broadcast %52 : vector<1x32xf32> to vector<8x32xf32>
    %73 = arith.addf %71, %72 : vector<8x32xf32>
    %74 = vector.shape_cast %73 : vector<8x32xf32> to vector<1x8x32xf32>
    %c0_36 = arith.constant 0 : index
    %c0_37 = arith.constant 0 : index
    %c0_38 = arith.constant 0 : index
    %75 = vector.load %arg12[%c0_36, %c0_37, %c0_38] : memref<1x8x32xf32, #tpu.memory_space<vmem>>, vector<1x8x32xf32>
    tpu.vector_store %arg12[%c0_36, %c0_37, %c0_38], %74 {strides = array<i32>} : memref<1x8x32xf32, #tpu.memory_space<vmem>>, vector<1x8x32xf32>,
    return
  }
  func.func @transform_0(%arg0: i32) -> (i32, i32, i32) {
    %c0_i32 = arith.constant 0 : i32
    %c0_i32_0 = arith.constant 0 : i32
    %c0_i32_1 = arith.constant 0 : i32
    return %arg0, %c0_i32, %c0_i32_0 : i32, i32, i32
  }
  func.func @transform_1(%arg0: i32) -> (i32, i32) {
    %c0_i32 = arith.constant 0 : i32
    %c0_i32_0 = arith.constant 0 : i32
    %c0_i32_1 = arith.constant 0 : i32
    return %c0_i32, %c0_i32_0 : i32, i32
  }
  func.func @transform_2(%arg0: i32) -> (i32, i32) {
    %c0_i32 = arith.constant 0 : i32
    %c0_i32_0 = arith.constant 0 : i32
    %c0_i32_1 = arith.constant 0 : i32
    return %c0_i32, %c0_i32_0 : i32, i32
  }
  func.func @transform_3(%arg0: i32) -> (i32, i32) {
    %c0_i32 = arith.constant 0 : i32
    %c0_i32_0 = arith.constant 0 : i32
    %c0_i32_1 = arith.constant 0 : i32
    return %c0_i32, %c0_i32_0 : i32, i32
  }
  func.func @transform_4(%arg0: i32) -> (i32, i32) {
    %c0_i32 = arith.constant 0 : i32
    %c0_i32_0 = arith.constant 0 : i32
    %c0_i32_1 = arith.constant 0 : i32
    return %c0_i32, %c0_i32_0 : i32, i32
  }
  func.func @transform_5(%arg0: i32) -> (i32, i32) {
    %c0_i32 = arith.constant 0 : i32
    %c0_i32_0 = arith.constant 0 : i32
    %c0_i32_1 = arith.constant 0 : i32
    return %c0_i32, %c0_i32_0 : i32, i32
  }
  func.func @transform_6(%arg0: i32) -> (i32, i32) {
    %c0_i32 = arith.constant 0 : i32
    %c0_i32_0 = arith.constant 0 : i32
    %c0_i32_1 = arith.constant 0 : i32
    return %c0_i32, %c0_i32_0 : i32, i32
  }
  func.func @transform_7(%arg0: i32) -> (i32, i32) {
    %c0_i32 = arith.constant 0 : i32
    %c0_i32_0 = arith.constant 0 : i32
    %c0_i32_1 = arith.constant 0 : i32
    return %c0_i32, %c0_i32_0 : i32, i32
  }
  func.func @transform_8(%arg0: i32) -> (i32, i32) {
    %c0_i32 = arith.constant 0 : i32
    %c0_i32_0 = arith.constant 0 : i32
    %c0_i32_1 = arith.constant 0 : i32
    return %c0_i32, %c0_i32_0 : i32, i32
  }
  func.func @transform_9(%arg0: i32) -> (i32, i32) {
    %c0_i32 = arith.constant 0 : i32
    %c0_i32_0 = arith.constant 0 : i32
    %c0_i32_1 = arith.constant 0 : i32
    return %c0_i32, %c0_i32_0 : i32, i32
  }
  func.func @transform_10(%arg0: i32) -> (i32, i32) {
    %c0_i32 = arith.constant 0 : i32
    %c0_i32_0 = arith.constant 0 : i32
    %c0_i32_1 = arith.constant 0 : i32
    return %c0_i32, %c0_i32_0 : i32, i32
  }
  func.func @transform_11(%arg0: i32) -> (i32, i32, i32) {
    %c0_i32 = arith.constant 0 : i32
    %c0_i32_0 = arith.constant 0 : i32
    %c0_i32_1 = arith.constant 0 : i32
    return %arg0, %c0_i32, %c0_i32_0 : i32, i32, i32
  }
}

</mosaic_0001>

<llo_original>
// kernel: _fsf_impl.1
$region0: #{_fsf_impl.1}
  #allocation0 [shape = 'u32[]', space=smem, size = 0x4, offset = 0x4, fixed_abs, tag = 'smem constant byte address 0x4 - core index']
  #allocation1 [shape = 'u32[144,128]{1,0:T(1,128)}', space=vmem, size = 0x12000, scoped, tag = 'internal scratch']
  %s0 = inlined_call_operand.vmem [shape: f32[2,8,32], index: 0, kind: input, shape index: {}]
  %s1 = inlined_call_operand.vmem [shape: bf16[16,8], index: 1, kind: input, shape index: {}]
  %s2 = inlined_call_operand.vmem [shape: bf16[64,32], index: 2, kind: input, shape index: {}]
  %s3 = inlined_call_operand.vmem [shape: f32[1,32], index: 3, kind: input, shape index: {}]
  %s4 = inlined_call_operand.vmem [shape: f32[1,32], index: 4, kind: input, shape index: {}]
  %s5 = inlined_call_operand.vmem [shape: bf16[32,64], index: 5, kind: input, shape index: {}]
  %s6 = inlined_call_operand.vmem [shape: f32[1,64], index: 6, kind: input, shape index: {}]
  %s7 = inlined_call_operand.vmem [shape: bf16[64,32], index: 7, kind: input, shape index: {}]
  %s8 = inlined_call_operand.vmem [shape: f32[1,32], index: 8, kind: input, shape index: {}]
  %s9 = inlined_call_operand.vmem [shape: f32[1,32], index: 9, kind: input, shape index: {}]
  %s10 = inlined_call_operand.vmem [shape: f32[1,32], index: 10, kind: input, shape index: {}]
  %s11 = inlined_call_operand.hbm [shape: f32[2,8,32], index: 11, kind: output, shape index: {}]
  %s12 = sld [smem:[#allocation0]]
  $region77: #{_fsf_impl.1} parent=0
    _
  %s14 = ssub.s32 1, %s12
  %s15 = scalar_select 0, %s14, %s12
  $region1: #{_fsf_impl.1} parent=0
    #allocation2 [shape = 'u8[8192]{0}', space=vmem, size = 0x2000, scoped, tag = 'output window, operand 0']
    #allocation3 [shape = 's32[2]{0}', space=sflag, size = 0x8, scoped, tag = 'scoped memory for _fsf_impl.1']
    %16 = vsyncpa [#allocation3], 0
    %s17 = scalar_lea.sflag [#allocation3], 1
    %18 = vsyncpa %s17, 0
    loop: start=0, step=1, limit=4
    $region2: #{_fsf_impl.1} parent=1 // loop_pre_header
      _
    $region3: #{_fsf_impl.1} parent=1 // loop_header
      %s20 = sphi 0, %s24
      %p21 = scmp.ge.s32.totalorder %s20, 4
      %s30 = sphi 0, %s32
      %s33 = sphi 0, %s30
      %s34 = sphi 0, %s33
      %s50 = sphi 0, %s34
      %s54 = sphi 0, %s54
      %s56 = sphi 0, %s54
      %s57 = sphi 0, %s56
      %s71 = sphi 0, %s57
      %s75 = sphi 0, %s75
      %s77 = sphi 0, %s75
      %s78 = sphi 0, %s77
      %s92 = sphi 0, %s78
      %s96 = sphi 0, %s96
      %s98 = sphi 0, %s96
      %s99 = sphi 0, %s98
      %s113 = sphi 0, %s99
      %s117 = sphi 0, %s117
      %s119 = sphi 0, %s117
      %s120 = sphi 0, %s119
      %s134 = sphi 0, %s120
      %s138 = sphi 0, %s138
      %s140 = sphi 0, %s138
      %s141 = sphi 0, %s140
      %s155 = sphi 0, %s141
      %s159 = sphi 0, %s159
      %s161 = sphi 0, %s159
      %s162 = sphi 0, %s161
      %s176 = sphi 0, %s162
      %s180 = sphi 0, %s180
      %s182 = sphi 0, %s180
      %s183 = sphi 0, %s182
      %s197 = sphi 0, %s183
      %s201 = sphi 0, %s201
      %s203 = sphi 0, %s201
      %s204 = sphi 0, %s203
      %s218 = sphi 0, %s204
      %s222 = sphi 0, %s222
      %s224 = sphi 0, %s222
      %s225 = sphi 0, %s224
      %s239 = sphi 0, %s225
      %s243 = sphi 0, %s243
      %s245 = sphi 0, %s243
      %s246 = sphi 0, %s245
      %s260 = sphi 0, %s246
      %s266 = sphi 0, %s268
      %s269 = sphi 0, %s266
      %s270 = sphi 0, %s269
      %s286 = sphi 0, %s270
    $region4: #{_fsf_impl.1} parent=1 // loop_header_branch
      %23 = sbr.rel (%p21) target = $region8
    $region5: #{_fsf_impl.1} parent=1 // loop_body
      %s25 = ssub.s32 %s20, 1
      %s26 = ssub.s32 %s20, 2
      %s27 = sadd.s32 %s20, 1
      %s28 = ssub.s32 %s20, %s27
      %p29 = scmp.eq.s32.totalorder %s28, 0
      %s31 = sadd.s32 %s30, 1
      %s32 = scalar_select %p29, %s30, %s31
      %p35 = pneg %p29
      %p36 = scmp.eq.s32.totalorder %s20, 1
      %p37 = por %p35, %p36
      %p38 = scmp.ne.s32.totalorder %s30, %s33
      %p39 = scmp.eq.s32.totalorder %s20, 0
      %p40 = por %p38, %p39
      %p41 = scmp.ne.s32.totalorder %s30, %s33
      %p42 = scmp.eq.s32.totalorder %s25, 1
      %p43 = por %p41, %p42
      %p44 = scmp.ne.s32.totalorder %s33, %s34
      %p45 = scmp.eq.s32.totalorder %s25, 0
      %p46 = por %p44, %p45
      %p47 = scmp.ne.s32.totalorder %s33, %s34
      %p48 = scmp.eq.s32.totalorder %s26, 1
      %p49 = por %p47, %p48
      %p51 = scmp.ne.s32.totalorder %s34, %s50
      %p52 = scmp.eq.s32.totalorder %s26, 0
      %p53 = por %p51, %p52
      %s55 = sadd.s32 %s54, 1
      %p58 = scmp.eq.s32.totalorder %s20, 1
      %p59 = scmp.ne.s32.totalorder %s54, %s56
      %p60 = scmp.eq.s32.totalorder %s20, 0
      %p61 = por %p59, %p60
      %p62 = scmp.ne.s32.totalorder %s54, %s56
      %p63 = scmp.eq.s32.totalorder %s25, 1
      %p64 = por %p62, %p63
      %p65 = scmp.ne.s32.totalorder %s56, %s57
      %p66 = scmp.eq.s32.totalorder %s25, 0
      %p67 = por %p65, %p66
      %p68 = scmp.ne.s32.totalorder %s56, %s57
      %p69 = scmp.eq.s32.totalorder %s26, 1
      %p70 = por %p68, %p69
      %p72 = scmp.ne.s32.totalorder %s57, %s71
      %p73 = scmp.eq.s32.totalorder %s26, 0
      %p74 = por %p72, %p73
      %s76 = sadd.s32 %s75, 1
      %p79 = scmp.eq.s32.totalorder %s20, 1
      %p80 = scmp.ne.s32.totalorder %s75, %s77
      %p81 = scmp.eq.s32.totalorder %s20, 0
      %p82 = por %p80, %p81
      %p83 = scmp.ne.s32.totalorder %s75, %s77
      %p84 = scmp.eq.s32.totalorder %s25, 1
      %p85 = por %p83, %p84
      %p86 = scmp.ne.s32.totalorder %s77, %s78
      %p87 = scmp.eq.s32.totalorder %s25, 0
      %p88 = por %p86, %p87
      %p89 = scmp.ne.s32.totalorder %s77, %s78
      %p90 = scmp.eq.s32.totalorder %s26, 1
      %p91 = por %p89, %p90
      %p93 = scmp.ne.s32.totalorder %s78, %s92
      %p94 = scmp.eq.s32.totalorder %s26, 0
      %p95 = por %p93, %p94
      %s97 = sadd.s32 %s96, 1
      %p100 = scmp.eq.s32.totalorder %s20, 1
      %p101 = scmp.ne.s32.totalorder %s96, %s98
      %p102 = scmp.eq.s32.totalorder %s20, 0
      %p103 = por %p101, %p102
      %p104 = scmp.ne.s32.totalorder %s96, %s98
      %p105 = scmp.eq.s32.totalorder %s25, 1
      %p106 = por %p104, %p105
      %p107 = scmp.ne.s32.totalorder %s98, %s99
      %p108 = scmp.eq.s32.totalorder %s25, 0
      %p109 = por %p107, %p108
      %p110 = scmp.ne.s32.totalorder %s98, %s99
      %p111 = scmp.eq.s32.totalorder %s26, 1
      %p112 = por %p110, %p111
      %p114 = scmp.ne.s32.totalorder %s99, %s113
      %p115 = scmp.eq.s32.totalorder %s26, 0
      %p116 = por %p114, %p115
      %s118 = sadd.s32 %s117, 1
      %p121 = scmp.eq.s32.totalorder %s20, 1
      %p122 = scmp.ne.s32.totalorder %s117, %s119
      %p123 = scmp.eq.s32.totalorder %s20, 0
      %p124 = por %p122, %p123
      %p125 = scmp.ne.s32.totalorder %s117, %s119
      %p126 = scmp.eq.s32.totalorder %s25, 1
      %p127 = por %p125, %p126
      %p128 = scmp.ne.s32.totalorder %s119, %s120
      %p129 = scmp.eq.s32.totalorder %s25, 0
      %p130 = por %p128, %p129
      %p131 = scmp.ne.s32.totalorder %s119, %s120
      %p132 = scmp.eq.s32.totalorder %s26, 1
      %p133 = por %p131, %p132
      %p135 = scmp.ne.s32.totalorder %s120, %s134
      %p136 = scmp.eq.s32.totalorder %s26, 0
      %p137 = por %p135, %p136
      %s139 = sadd.s32 %s138, 1
      %p142 = scmp.eq.s32.totalorder %s20, 1
      %p143 = scmp.ne.s32.totalorder %s138, %s140
      %p144 = scmp.eq.s32.totalorder %s20, 0
      %p145 = por %p143, %p144
      %p146 = scmp.ne.s32.totalorder %s138, %s140
      %p147 = scmp.eq.s32.totalorder %s25, 1
      %p148 = por %p146, %p147
      %p149 = scmp.ne.s32.totalorder %s140, %s141
      %p150 = scmp.eq.s32.totalorder %s25, 0
      %p151 = por %p149, %p150
      %p152 = scmp.ne.s32.totalorder %s140, %s141
      %p153 = scmp.eq.s32.totalorder %s26, 1
      %p154 = por %p152, %p153
      %p156 = scmp.ne.s32.totalorder %s141, %s155
      %p157 = scmp.eq.s32.totalorder %s26, 0
      %p158 = por %p156, %p157
      %s160 = sadd.s32 %s159, 1
      %p163 = scmp.eq.s32.totalorder %s20, 1
      %p164 = scmp.ne.s32.totalorder %s159, %s161
      %p165 = scmp.eq.s32.totalorder %s20, 0
      %p166 = por %p164, %p165
      %p167 = scmp.ne.s32.totalorder %s159, %s161
      %p168 = scmp.eq.s32.totalorder %s25, 1
      %p169 = por %p167, %p168
      %p170 = scmp.ne.s32.totalorder %s161, %s162
      %p171 = scmp.eq.s32.totalorder %s25, 0
      %p172 = por %p170, %p171
      %p173 = scmp.ne.s32.totalorder %s161, %s162
      %p174 = scmp.eq.s32.totalorder %s26, 1
      %p175 = por %p173, %p174
      %p177 = scmp.ne.s32.totalorder %s162, %s176
      %p178 = scmp.eq.s32.totalorder %s26, 0
      %p179 = por %p177, %p178
      %s181 = sadd.s32 %s180, 1
      %p184 = scmp.eq.s32.totalorder %s20, 1
      %p185 = scmp.ne.s32.totalorder %s180, %s182
      %p186 = scmp.eq.s32.totalorder %s20, 0
      %p187 = por %p185, %p186
      %p188 = scmp.ne.s32.totalorder %s180, %s182
      %p189 = scmp.eq.s32.totalorder %s25, 1
      %p190 = por %p188, %p189
      %p191 = scmp.ne.s32.totalorder %s182, %s183
      %p192 = scmp.eq.s32.totalorder %s25, 0
      %p193 = por %p191, %p192
      %p194 = scmp.ne.s32.totalorder %s182, %s183
      %p195 = scmp.eq.s32.totalorder %s26, 1
      %p196 = por %p194, %p195
      %p198 = scmp.ne.s32.totalorder %s183, %s197
      %p199 = scmp.eq.s32.totalorder %s26, 0
      %p200 = por %p198, %p199
      %s202 = sadd.s32 %s201, 1
      %p205 = scmp.eq.s32.totalorder %s20, 1
      %p206 = scmp.ne.s32.totalorder %s201, %s203
      %p207 = scmp.eq.s32.totalorder %s20, 0
      %p208 = por %p206, %p207
      %p209 = scmp.ne.s32.totalorder %s201, %s203
      %p210 = scmp.eq.s32.totalorder %s25, 1
      %p211 = por %p209, %p210
      %p212 = scmp.ne.s32.totalorder %s203, %s204
      %p213 = scmp.eq.s32.totalorder %s25, 0
      %p214 = por %p212, %p213
      %p215 = scmp.ne.s32.totalorder %s203, %s204
      %p216 = scmp.eq.s32.totalorder %s26, 1
      %p217 = por %p215, %p216
      %p219 = scmp.ne.s32.totalorder %s204, %s218
      %p220 = scmp.eq.s32.totalorder %s26, 0
      %p221 = por %p219, %p220
      %s223 = sadd.s32 %s222, 1
      %p226 = scmp.eq.s32.totalorder %s20, 1
      %p227 = scmp.ne.s32.totalorder %s222, %s224
      %p228 = scmp.eq.s32.totalorder %s20, 0
      %p229 = por %p227, %p228
      %p230 = scmp.ne.s32.totalorder %s222, %s224
      %p231 = scmp.eq.s32.totalorder %s25, 1
      %p232 = por %p230, %p231
      %p233 = scmp.ne.s32.totalorder %s224, %s225
      %p234 = scmp.eq.s32.totalorder %s25, 0
      %p235 = por %p233, %p234
      %p236 = scmp.ne.s32.totalorder %s224, %s225
      %p237 = scmp.eq.s32.totalorder %s26, 1
      %p238 = por %p236, %p237
      %p240 = scmp.ne.s32.totalorder %s225, %s239
      %p241 = scmp.eq.s32.totalorder %s26, 0
      %p242 = por %p240, %p241
      %s244 = sadd.s32 %s243, 1
      %p247 = scmp.eq.s32.totalorder %s20, 1
      %p248 = scmp.ne.s32.totalorder %s243, %s245
      %p249 = scmp.eq.s32.totalorder %s20, 0
      %p250 = por %p248, %p249
      %p251 = scmp.ne.s32.totalorder %s243, %s245
      %p252 = scmp.eq.s32.totalorder %s25, 1
      %p253 = por %p251, %p252
      %p254 = scmp.ne.s32.totalorder %s245, %s246
      %p255 = scmp.eq.s32.totalorder %s25, 0
      %p256 = por %p254, %p255
      %p257 = scmp.ne.s32.totalorder %s245, %s246
      %p258 = scmp.eq.s32.totalorder %s26, 1
      %p259 = por %p257, %p258
      %p261 = scmp.ne.s32.totalorder %s246, %s260
      %p262 = scmp.eq.s32.totalorder %s26, 0
      %p263 = por %p261, %p262
      %s264 = ssub.s32 %s20, %s27
      %p265 = scmp.eq.s32.totalorder %s264, 0
      %s267 = sadd.s32 %s266, 1
      %s268 = scalar_select %p265, %s266, %s267
      %p271 = pneg %p265
      %p272 = scmp.eq.s32.totalorder %s20, 1
      %p273 = por %p271, %p272
      %p274 = scmp.ne.s32.totalorder %s266, %s269
      %p275 = scmp.eq.s32.totalorder %s20, 0
      %p276 = por %p274, %p275
      %p277 = scmp.ne.s32.totalorder %s266, %s269
      %p278 = scmp.eq.s32.totalorder %s25, 1
      %p279 = por %p277, %p278
      %p280 = scmp.ne.s32.totalorder %s269, %s270
      %p281 = scmp.eq.s32.totalorder %s25, 0
      %p282 = por %p280, %p281
      %p283 = scmp.ne.s32.totalorder %s269, %s270
      %p284 = scmp.eq.s32.totalorder %s26, 1
      %p285 = por %p283, %p284
      %p287 = scmp.ne.s32.totalorder %s270, %s286
      %p288 = scmp.eq.s32.totalorder %s26, 0
      %p289 = por %p287, %p288
      %p290 = scmp.le.s32.totalorder 1, %s20
      %p291 = scmp.lt.s32.totalorder %s20, 3
      %p292 = pnand %p290, %p291
      %p293 = pneg %p292
      // Predicated region
      $region9: #{_fsf_impl.1} parent=5 // pred_check
        _
      $region10: #{_fsf_impl.1} parent=5 // pred_check_branch
        %295 = sbr.rel (%p292) target = $region12
      $region11: #{_fsf_impl.1} parent=5 // pred_region
        %s296 = ssub.s32 %s20, 1
        // Predicated region
        $region13: #{_fsf_impl.1} parent=11 // pred_check
          %p297 = pneg %p67
        $region14: #{_fsf_impl.1} parent=11 // pred_check_branch
          %299 = sbr.rel (%p297) target = $region16
        $region15: #{_fsf_impl.1} parent=11 // pred_region
          _
        $region16: #{_fsf_impl.1} parent=11 // pred_fallthru
          _
        // Predicated region
        $region17: #{_fsf_impl.1} parent=11 // pred_check
          %p300 = pneg %p88
        $region18: #{_fsf_impl.1} parent=11 // pred_check_branch
          %302 = sbr.rel (%p300) target = $region20
        $region19: #{_fsf_impl.1} parent=11 // pred_region
          _
        $region20: #{_fsf_impl.1} parent=11 // pred_fallthru
          _
        // Predicated region
        $region21: #{_fsf_impl.1} parent=11 // pred_check
          %p303 = pneg %p109
        $region22: #{_fsf_impl.1} parent=11 // pred_check_branch
          %305 = sbr.rel (%p303) target = $region24
        $region23: #{_fsf_impl.1} parent=11 // pred_region
          _
        $region24: #{_fsf_impl.1} parent=11 // pred_fallthru
          _
        // Predicated region
        $region25: #{_fsf_impl.1} parent=11 // pred_check
          %p306 = pneg %p130
        $region26: #{_fsf_impl.1} parent=11 // pred_check_branch
          %308 = sbr.rel (%p306) target = $region28
        $region27: #{_fsf_impl.1} parent=11 // pred_region
          _
        $region28: #{_fsf_impl.1} parent=11 // pred_fallthru
          _
        // Predicated region
        $region29: #{_fsf_impl.1} parent=11 // pred_check
          %p309 = pneg %p151
        $region30: #{_fsf_impl.1} parent=11 // pred_check_branch
          %311 = sbr.rel (%p309) target = $region32
        $region31: #{_fsf_impl.1} parent=11 // pred_region
          _
        $region32: #{_fsf_impl.1} parent=11 // pred_fallthru
          _
        // Predicated region
        $region33: #{_fsf_impl.1} parent=11 // pred_check
          %p312 = pneg %p172
        $region34: #{_fsf_impl.1} parent=11 // pred_check_branch
          %314 = sbr.rel (%p312) target = $region36
        $region35: #{_fsf_impl.1} parent=11 // pred_region
          _
        $region36: #{_fsf_impl.1} parent=11 // pred_fallthru
          _
        // Predicated region
        $region37: #{_fsf_impl.1} parent=11 // pred_check
          %p315 = pneg %p193
        $region38: #{_fsf_impl.1} parent=11 // pred_check_branch
          %317 = sbr.rel (%p315) target = $region40
        $region39: #{_fsf_impl.1} parent=11 // pred_region
          _
        $region40: #{_fsf_impl.1} parent=11 // pred_fallthru
          _
        // Predicated region
        $region41: #{_fsf_impl.1} parent=11 // pred_check
          %p318 = pneg %p214
        $region42: #{_fsf_impl.1} parent=11 // pred_check_branch
          %320 = sbr.rel (%p318) target = $region44
        $region43: #{_fsf_impl.1} parent=11 // pred_region
          _
        $region44: #{_fsf_impl.1} parent=11 // pred_fallthru
          _
        // Predicated region
        $region45: #{_fsf_impl.1} parent=11 // pred_check
          %p321 = pneg %p235
        $region46: #{_fsf_impl.1} parent=11 // pred_check_branch
          %323 = sbr.rel (%p321) target = $region48
        $region47: #{_fsf_impl.1} parent=11 // pred_region
          _
        $region48: #{_fsf_impl.1} parent=11 // pred_fallthru
          _
        // Predicated region
        $region49: #{_fsf_impl.1} parent=11 // pred_check
          %p324 = pneg %p256
        $region50: #{_fsf_impl.1} parent=11 // pred_check_branch
          %326 = sbr.rel (%p324) target = $region52
        $region51: #{_fsf_impl.1} parent=11 // pred_region
          _
        $region52: #{_fsf_impl.1} parent=11 // pred_fallthru
          _
      $region12: #{_fsf_impl.1} parent=5 // pred_fallthru
        _
      %p327 = scmp.lt.s32.totalorder %s20, 2
      // Predicated region
      $region53: #{_fsf_impl.1} parent=5 // pred_check
        %p328 = pneg %p327
      $region54: #{_fsf_impl.1} parent=5 // pred_check_branch
        %330 = sbr.rel (%p328) target = $region56
      $region55: #{_fsf_impl.1} parent=5 // pred_region
        // Predicated region
        $region57: #{_fsf_impl.1} parent=55 // pred_check
          %p331 = pneg %p40
        $region58: #{_fsf_impl.1} parent=55 // pred_check_branch
          %333 = sbr.rel (%p331) target = $region60
        $region59: #{_fsf_impl.1} parent=55 // pred_region
          %p334 = scmp.lt.s32.totalorder %s20, 1
          %s335 = scalar_select %p334, %s20, 1
          %s336 = smul.addr %s335, 8
          %s337 = scalar_lea.vmem %s0, %s336
        $region60: #{_fsf_impl.1} parent=55 // pred_fallthru
          _
      $region56: #{_fsf_impl.1} parent=5 // pred_fallthru
        _
      %p338 = scmp.le.s32.totalorder 1, %s20
      %p339 = scmp.lt.s32.totalorder %s20, 3
      %p340 = pnand %p338, %p339
      %p341 = pneg %p340
      // Predicated region
      $region61: #{_fsf_impl.1} parent=5 // pred_check
        _
      $region62: #{_fsf_impl.1} parent=5 // pred_check_branch
        %343 = sbr.rel (%p340) target = $region64
      $region63: #{_fsf_impl.1} parent=5 // pred_region
        %s344 = ssub.s32 %s20, 1
        %p345 = scmp.lt.s32.totalorder %s25, 1
        %s346 = scalar_select %p345, %s25, 1
        %s347 = smul.addr %s346, 8
        %s348 = scalar_lea.vmem %s0, %s347
        %p349 = pneg %p46
        %p350 = pneg %p43
        %p351 = pneg %p67
        %p352 = pneg %p64
        %p353 = pneg %p88
        %p354 = pneg %p85
        %p355 = pneg %p109
        %p356 = pneg %p106
        %p357 = pneg %p130
        %p358 = pneg %p127
        %p359 = pneg %p151
        %p360 = pneg %p148
        %p361 = pneg %p172
        %p362 = pneg %p169
        %p363 = pneg %p193
        %p364 = pneg %p190
        %p365 = pneg %p214
        %p366 = pneg %p211
        %p367 = pneg %p235
        %p368 = pneg %p232
        %p369 = pneg %p256
        %p370 = pneg %p253
        %p371 = pneg %p282
        %p372 = pneg %p279
        %s373 = sand.u32 %s269, 1
        %s374 = scalar_lea.sflag [#allocation3], %s373
        %s375 = sand.u32 %s269, 1
        %s376 = smul.addr %s375, 8
        %s377 = scalar_lea.vmem [#allocation2], %s376
        %p378 = scmp.lt.s32.totalorder %s25, 1
        %s379 = scalar_select %p378, %s25, 1
        %s380 = smul.addr %s379, 8
        %s381 = scalar_lea.vmem %s0, %s380
        %v383 = vld [vmem:[%s381] sm:$0xff]
        %v384 = vpack.c.bf16 %v383, %v383
        %v385 = vld [vmem:[%s1] sm:$0xf]
        %v386 = vld [vmem:[%s1 + $0x4] sm:$0xf]
        %v389 = vunpack.c.l.b16 %v385
        %v390 = vunpack.c.l.b16 %v386
        %v391 = vpack.c.b16 %v390, %v389
        %vm392 = vcmask 64512
        %v394 = vsel %vm392, %v391, 0
        %vm396 = vcmask 1043456
        %v398 = vsel %vm396, %v384, 0
        %400 = vmatprep.subr.bf16.mxu0 0
        %401 = vmatpush1.bf16.msra.mxu0 %v398
        %402 = vmatprep.subr.bf16.mxu0 0
        %403 = vmatpush1.bf16.msra.mxu0 0
        %404 = vmatprep.subr.bf16.mxu0 0
        %405 = vmatpush1.bf16.msra.mxu0 0
        %406 = vmatprep.subr.bf16.mxu0 0
        %407 = vmatpush1.bf16.msra.mxu0 0
        %408 = vmatprep.subr.bf16.mxu0 0
        %409 = vmatpush1.bf16.msra.mxu0 0
        %410 = vmatprep.subr.bf16.mxu0 0
        %411 = vmatpush1.bf16.msra.mxu0 0
        %412 = vmatprep.subr.bf16.mxu0 0
        %413 = vmatpush1.bf16.msra.mxu0 0
        %414 = vmatprep.subr.bf16.mxu0 0
        %415 = vmatpush1.bf16.msra.mxu0 0
        %416 = vmatprep.subr.bf16.mxu0 0
        %417 = vmatpush1.bf16.msra.mxu0 0
        %418 = vmatprep.subr.bf16.mxu0 0
        %419 = vmatpush1.bf16.msra.mxu0 0
        %420 = vmatprep.subr.bf16.mxu0 0
        %421 = vmatpush1.bf16.msra.mxu0 0
        %422 = vmatprep.subr.bf16.mxu0 0
        %423 = vmatpush1.bf16.msra.mxu0 0
        %424 = vmatprep.subr.bf16.mxu0 0
        %425 = vmatpush1.bf16.msra.mxu0 0
        %426 = vmatprep.subr.bf16.mxu0 0
        %427 = vmatpush1.bf16.msra.mxu0 0
        %428 = vmatprep.subr.bf16.mxu0 0
        %429 = vmatpush1.bf16.msra.mxu0 0
        %430 = vmatprep.subr.bf16.mxu0 0
        %431 = vmatpush1.bf16.msra.mxu0 0
        %432 = vmatprep.mubr.bf16.mxu0 0
        %433 = vmatmul.mubr.bf16.gmra.mrb[0].mxu0 %v394
        %v434 = vpop.f32.mrb[0].mxu0
        %v435 = vadd.f32 0.0, %v434
        %v436 = vpop.f32.mrb[0].mxu0
        %v437 = vpop.f32.mrb[0].mxu0
        %v438 = vadd.f32 0.0, %v437
        %v439 = vpop.f32.mrb[0].mxu0
        %440 = vdwg.mxu0
        %442 = vrot.lane.b32.xlu0 %v438, 32
        %v443 = vpop.permute.xlu0 %442
        %vm445 = vcmask 261120
        %v446 = vsel %vm445, %v435, %v443
        %v447 = vpack.c.bf16 %v446, %v446
        %v448 = vld [vmem:[%s2] sm:$0xf]
        %v449 = vld [vmem:[%s2 + $0x4] sm:$0xf]
        %v450 = vld [vmem:[%s2 + $0x8] sm:$0xf]
        %v451 = vld [vmem:[%s2 + $0xc] sm:$0xf]
        %v452 = vld [vmem:[%s2 + $0x10] sm:$0xf]
        %v453 = vld [vmem:[%s2 + $0x14] sm:$0xf]
        %v454 = vld [vmem:[%s2 + $0x18] sm:$0xf]
        %v455 = vld [vmem:[%s2 + $0x1c] sm:$0xf]
        %v464 = vunpack.c.l.b16 %v448
        %v465 = vunpack.c.l.b16 %v449
        %v466 = vunpack.c.l.b16 %v450
        %v467 = vunpack.c.l.b16 %v451
        %v468 = vunpack.c.l.b16 %v452
        %v469 = vunpack.c.l.b16 %v453
        %v470 = vunpack.c.l.b16 %v454
        %v471 = vunpack.c.l.b16 %v455
        %v472 = vpack.c.b16 %v465, %v464
        %v473 = vpack.c.b16 %v467, %v466
        %v474 = vpack.c.b16 %v469, %v468
        %v475 = vpack.c.b16 %v471, %v470
        %vm480 = vcmask 523264
        %v482 = vsel %vm480, %v447, 0
        %484 = vmatprep.subr.bf16.mxu0 0
        %485 = vmatpush1.bf16.msra.mxu0 %v472
        %486 = vmatprep.subr.bf16.mxu0 0
        %487 = vmatpush1.bf16.msra.mxu0 %v473
        %488 = vmatprep.subr.bf16.mxu0 0
        %489 = vmatpush1.bf16.msra.mxu0 %v474
        %490 = vmatprep.subr.bf16.mxu0 0
        %491 = vmatpush1.bf16.msra.mxu0 %v475
        %492 = vmatprep.subr.bf16.mxu0 0
        %493 = vmatpush1.bf16.msra.mxu0 0
        %494 = vmatprep.subr.bf16.mxu0 0
        %495 = vmatpush1.bf16.msra.mxu0 0
        %496 = vmatprep.subr.bf16.mxu0 0
        %497 = vmatpush1.bf16.msra.mxu0 0
        %498 = vmatprep.subr.bf16.mxu0 0
        %499 = vmatpush1.bf16.msra.mxu0 0
        %500 = vmatprep.subr.bf16.mxu0 0
        %501 = vmatpush1.bf16.msra.mxu0 0
        %502 = vmatprep.subr.bf16.mxu0 0
        %503 = vmatpush1.bf16.msra.mxu0 0
        %504 = vmatprep.subr.bf16.mxu0 0
        %505 = vmatpush1.bf16.msra.mxu0 0
        %506 = vmatprep.subr.bf16.mxu0 0
        %507 = vmatpush1.bf16.msra.mxu0 0
        %508 = vmatprep.subr.bf16.mxu0 0
        %509 = vmatpush1.bf16.msra.mxu0 0
        %510 = vmatprep.subr.bf16.mxu0 0
        %511 = vmatpush1.bf16.msra.mxu0 0
        %512 = vmatprep.subr.bf16.mxu0 0
        %513 = vmatpush1.bf16.msra.mxu0 0
        %514 = vmatprep.subr.bf16.mxu0 0
        %515 = vmatpush1.bf16.msra.mxu0 0
        %516 = vmatprep.mubr.bf16.mxu0 0
        %517 = vmatmul.mubr.bf16.gmra.mrb[0].mxu0 %v482
        %v518 = vpop.f32.mrb[0].mxu0
        %v519 = vadd.f32 0.0, %v518
        %v520 = vpop.f32.mrb[0].mxu0
        %v521 = vpop.f32.mrb[0].mxu0
        %v522 = vpop.f32.mrb[0].mxu0
        %523 = vdwg.mxu0
        %v524 = vadd.f32 %v383, %v519
        %v525 = vld [vmem:[%s3] sm:$0x1]
        %v526 = vld [vmem:[%s4] sm:$0x1]
        %v527 = vsel %vm445, %v524, 0.0
        %528 = vadd.xlane.f32.xlu0 %v527
        %v529 = vpop.xlane.xlu0 %528
        %v530 = vrcp.pop 32.0
        %v531 = vmul.f32 %v529, %v530
        %v532 = vsub.f32 %v524, %v531
        %v533 = vmul.f32 %v532, %v532
        %v534 = vsel %vm445, %v533, 0.0
        %535 = vadd.xlane.f32.xlu0 %v534
        %v536 = vpop.xlane.xlu0 %535
        %v537 = vrcp.pop 31.0
        %v538 = vmul.f32 %v536, %v537
        %v539 = vrsqrt.pop %v538
        %v540 = vmul.f32 %v538, %v539
        %vm541 = vcmp.eq.f32.partialorder %v538, inf
        %v542 = vsel %vm541, %v538, %v540
        %vm543 = vcmp.eq.f32.partialorder %v538, 0.0
        %v544 = vand.u32 %v538, 2147483648
        %v545 = vsel %vm543, %v544, %v542
        %v546 = vadd.f32 %v545, 1e-06
        %v547 = vrcp.pop %v546
        %v549 = vlaneseq
        %v550 = vshrl.u32 %v549, 7
        %v551 = vsub.s32 0, %v550
        %v552 = vrot.slane %v525, %v551
        %v554 = vmul.f32 %v552, %v532
        %v555 = vmul.f32 %v554, %v547
        %v557 = vlaneseq
        %v558 = vshrl.u32 %v557, 7
        %v559 = vsub.s32 0, %v558
        %v560 = vrot.slane %v526, %v559
        %v562 = vadd.f32 %v555, %v560
        %v563 = vpack.c.bf16 %v562, %v562
        %v564 = vld [vmem:[%s5] sm:$0xf]
        %v565 = vld [vmem:[%s5 + $0x4] sm:$0xf]
        %v566 = vld [vmem:[%s5 + $0x8] sm:$0xf]
        %v567 = vld [vmem:[%s5 + $0xc] sm:$0xf]
        %v568 = vld [vmem:[%s6] sm:$0x1]
        %v570 = vlaneseq
        %v571 = vshrl.u32 %v570, 7
        %v572 = vsub.s32 0, %v571
        %v573 = vrot.slane %v568, %v572
        %v579 = vunpack.c.l.b16 %v564
        %v580 = vunpack.c.l.b16 %v565
        %v581 = vunpack.c.l.b16 %v566
        %v582 = vunpack.c.l.b16 %v567
        %v583 = vpack.c.b16 %v580, %v579
        %v584 = vpack.c.b16 %v582, %v581
        %v588 = vsel %vm445, %v563, 0
        %590 = vmatprep.subr.bf16.mxu0 0
        %591 = vmatpush1.bf16.msra.mxu0 %v583
        %592 = vmatprep.subr.bf16.mxu0 0
        %593 = vmatpush1.bf16.msra.mxu0 %v584
        %594 = vmatprep.subr.bf16.mxu0 0
        %595 = vmatpush1.bf16.msra.mxu0 0
        %596 = vmatprep.subr.bf16.mxu0 0
        %597 = vmatpush1.bf16.msra.mxu0 0
        %598 = vmatprep.subr.bf16.mxu0 0
        %599 = vmatpush1.bf16.msra.mxu0 0
        %600 = vmatprep.subr.bf16.mxu0 0
        %601 = vmatpush1.bf16.msra.mxu0 0
        %602 = vmatprep.subr.bf16.mxu0 0
        %603 = vmatpush1.bf16.msra.mxu0 0
        %604 = vmatprep.subr.bf16.mxu0 0
        %605 = vmatpush1.bf16.msra.mxu0 0
        %606 = vmatprep.subr.bf16.mxu0 0
        %607 = vmatpush1.bf16.msra.mxu0 0
        %608 = vmatprep.subr.bf16.mxu0 0
        %609 = vmatpush1.bf16.msra.mxu0 0
        %610 = vmatprep.subr.bf16.mxu0 0
        %611 = vmatpush1.bf16.msra.mxu0 0
        %612 = vmatprep.subr.bf16.mxu0 0
        %613 = vmatpush1.bf16.msra.mxu0 0
        %614 = vmatprep.subr.bf16.mxu0 0
        %615 = vmatpush1.bf16.msra.mxu0 0
        %616 = vmatprep.subr.bf16.mxu0 0
        %617 = vmatpush1.bf16.msra.mxu0 0
        %618 = vmatprep.subr.bf16.mxu0 0
        %619 = vmatpush1.bf16.msra.mxu0 0
        %620 = vmatprep.subr.bf16.mxu0 0
        %621 = vmatpush1.bf16.msra.mxu0 0
        %622 = vmatprep.mubr.bf16.mxu0 0
        %623 = vmatmul.mubr.bf16.gmra.mrb[0].mxu0 %v588
        %v624 = vpop.f32.mrb[0].mxu0
        %v625 = vadd.f32 %v573, %v624
        %v626 = vpop.f32.mrb[0].mxu0
        %v627 = vpop.f32.mrb[0].mxu0
        %v628 = vpop.f32.mrb[0].mxu0
        %629 = vdwg.mxu0
        %v630 = vmax.f32 %v625, 0.0
        %v631 = vpack.c.bf16 %v630, %v630
        %v632 = vld [vmem:[%s7] sm:$0xf]
        %v633 = vld [vmem:[%s7 + $0x4] sm:$0xf]
        %v634 = vld [vmem:[%s7 + $0x8] sm:$0xf]
        %v635 = vld [vmem:[%s7 + $0xc] sm:$0xf]
        %v636 = vld [vmem:[%s7 + $0x10] sm:$0xf]
        %v637 = vld [vmem:[%s7 + $0x14] sm:$0xf]
        %v638 = vld [vmem:[%s7 + $0x18] sm:$0xf]
        %v639 = vld [vmem:[%s7 + $0x1c] sm:$0xf]
        %v640 = vld [vmem:[%s8] sm:$0x1]
        %v642 = vlaneseq
        %v643 = vshrl.u32 %v642, 7
        %v644 = vsub.s32 0, %v643
        %v645 = vrot.slane %v640, %v644
        %v655 = vunpack.c.l.b16 %v632
        %v656 = vunpack.c.l.b16 %v633
        %v657 = vunpack.c.l.b16 %v634
        %v658 = vunpack.c.l.b16 %v635
        %v659 = vunpack.c.l.b16 %v636
        %v660 = vunpack.c.l.b16 %v637
        %v661 = vunpack.c.l.b16 %v638
        %v662 = vunpack.c.l.b16 %v639
        %v663 = vpack.c.b16 %v656, %v655
        %v664 = vpack.c.b16 %v658, %v657
        %v665 = vpack.c.b16 %v660, %v659
        %v666 = vpack.c.b16 %v662, %v661
        %v672 = vsel %vm480, %v631, 0
        %674 = vmatprep.subr.bf16.mxu0 0
        %675 = vmatpush1.bf16.msra.mxu0 %v663
        %676 = vmatprep.subr.bf16.mxu0 0
        %677 = vmatpush1.bf16.msra.mxu0 %v664
        %678 = vmatprep.subr.bf16.mxu0 0
        %679 = vmatpush1.bf16.msra.mxu0 %v665
        %680 = vmatprep.subr.bf16.mxu0 0
        %681 = vmatpush1.bf16.msra.mxu0 %v666
        %682 = vmatprep.subr.bf16.mxu0 0
        %683 = vmatpush1.bf16.msra.mxu0 0
        %684 = vmatprep.subr.bf16.mxu0 0
        %685 = vmatpush1.bf16.msra.mxu0 0
        %686 = vmatprep.subr.bf16.mxu0 0
        %687 = vmatpush1.bf16.msra.mxu0 0
        %688 = vmatprep.subr.bf16.mxu0 0
        %689 = vmatpush1.bf16.msra.mxu0 0
        %690 = vmatprep.subr.bf16.mxu0 0
        %691 = vmatpush1.bf16.msra.mxu0 0
        %692 = vmatprep.subr.bf16.mxu0 0
        %693 = vmatpush1.bf16.msra.mxu0 0
        %694 = vmatprep.subr.bf16.mxu0 0
        %695 = vmatpush1.bf16.msra.mxu0 0
        %696 = vmatprep.subr.bf16.mxu0 0
        %697 = vmatpush1.bf16.msra.mxu0 0
        %698 = vmatprep.subr.bf16.mxu0 0
        %699 = vmatpush1.bf16.msra.mxu0 0
        %700 = vmatprep.subr.bf16.mxu0 0
        %701 = vmatpush1.bf16.msra.mxu0 0
        %702 = vmatprep.subr.bf16.mxu0 0
        %703 = vmatpush1.bf16.msra.mxu0 0
        %704 = vmatprep.subr.bf16.mxu0 0
        %705 = vmatpush1.bf16.msra.mxu0 0
        %706 = vmatprep.mubr.bf16.mxu0 0
        %707 = vmatmul.mubr.bf16.gmra.mrb[0].mxu0 %v672
        %v708 = vpop.f32.mrb[0].mxu0
        %v709 = vadd.f32 %v645, %v708
        %v710 = vpop.f32.mrb[0].mxu0
        %v711 = vpop.f32.mrb[0].mxu0
        %v712 = vpop.f32.mrb[0].mxu0
        %713 = vdwg.mxu0
        %v714 = vadd.f32 %v562, %v709
        %v715 = vld [vmem:[%s9] sm:$0x1]
        %v716 = vld [vmem:[%s10] sm:$0x1]
        %v717 = vsel %vm445, %v714, 0.0
        %718 = vadd.xlane.f32.xlu0 %v717
        %v719 = vpop.xlane.xlu0 %718
        %v720 = vmul.f32 %v719, %v530
        %v721 = vsub.f32 %v714, %v720
        %v722 = vmul.f32 %v721, %v721
        %v723 = vsel %vm445, %v722, 0.0
        %724 = vadd.xlane.f32.xlu0 %v723
        %v725 = vpop.xlane.xlu0 %724
        %v726 = vmul.f32 %v725, %v537
        %v727 = vrsqrt.pop %v726
        %v728 = vmul.f32 %v726, %v727
        %vm729 = vcmp.eq.f32.partialorder %v726, inf
        %v730 = vsel %vm729, %v726, %v728
        %vm731 = vcmp.eq.f32.partialorder %v726, 0.0
        %v732 = vand.u32 %v726, 2147483648
        %v733 = vsel %vm731, %v732, %v730
        %v734 = vadd.f32 %v733, 1e-06
        %v735 = vrcp.pop %v734
        %v737 = vlaneseq
        %v738 = vshrl.u32 %v737, 7
        %v739 = vsub.s32 0, %v738
        %v740 = vrot.slane %v715, %v739
        %v742 = vmul.f32 %v740, %v721
        %v743 = vmul.f32 %v742, %v735
        %v745 = vlaneseq
        %v746 = vshrl.u32 %v745, 7
        %v747 = vsub.s32 0, %v746
        %v748 = vrot.slane %v716, %v747
        %v750 = vadd.f32 %v743, %v748
        %751 = vst.msk [vmem:[%s377] sm:$0xff] %vm445, %v750
        %s752 = sand.u32 %s269, 1
        %s753 = scalar_lea.sflag [#allocation3], %s752
        %s754 = sand.u32 %s269, 1
        %s755 = smul.addr %s754, 8
        %s756 = scalar_lea.vmem [#allocation2], %s755
        // Predicated region
        $region65: #{_fsf_impl.1} parent=63 // pred_check
          %p757 = pneg %p279
        $region66: #{_fsf_impl.1} parent=63 // pred_check_branch
          %759 = sbr.rel (%p757) target = $region68
        $region67: #{_fsf_impl.1} parent=63 // pred_region
          %s761 = ssub.s32 128, 128
          %762 = vsyncadd %s753, %s761
          %s763 = smul.addr %s25, 128
          %s764 = scalar_lea.hbm %s11, %s763
          %s766 = sshll.u32 %s756, 4
          %s767 = int_to_ptr.vmem [resolvable:$true] %s766
          %769 = dma.vmem_to_hbm [thread:$0]  %s767, 128, %s764, %s753
        $region68: #{_fsf_impl.1} parent=63 // pred_fallthru
          _
      $region64: #{_fsf_impl.1} parent=5 // pred_fallthru
        _
      %p770 = scmp.le.s32.totalorder 2, %s20
      // Predicated region
      $region69: #{_fsf_impl.1} parent=5 // pred_check
        %p771 = pneg %p770
      $region70: #{_fsf_impl.1} parent=5 // pred_check_branch
        %773 = sbr.rel (%p771) target = $region72
      $region71: #{_fsf_impl.1} parent=5 // pred_region
        %s774 = ssub.s32 %s20, 2
        // Predicated region
        $region73: #{_fsf_impl.1} parent=71 // pred_check
          %p775 = pneg %p285
        $region74: #{_fsf_impl.1} parent=71 // pred_check_branch
          %777 = sbr.rel (%p775) target = $region76
        $region75: #{_fsf_impl.1} parent=71 // pred_region
          %s778 = sand.u32 %s270, 1
          %s779 = scalar_lea.sflag [#allocation3], %s778
          %s780 = sand.u32 %s270, 1
          %s781 = smul.addr %s780, 8
          %s782 = scalar_lea.vmem [#allocation2], %s781
          %783 = dma.done %s779, 128
        $region76: #{_fsf_impl.1} parent=71 // pred_fallthru
          _
      $region72: #{_fsf_impl.1} parent=5 // pred_fallthru
        _
    $region6: #{_fsf_impl.1} parent=1 // loop_footer
      %s24 = sadd.s32 1, %s20
    $region7: #{_fsf_impl.1} parent=1 // loop_footer_branch
      %19 = sbr.rel target = $region3
    $region8: #{_fsf_impl.1} parent=1 // loop_exit
      _
    %784 = vsyncpa [#allocation3], 1
    %s785 = scalar_lea.sflag [#allocation3], 1
    %786 = vsyncpa %s785, 1

// kernel: _fsf_impl.1
$region0: #{_fsf_impl.1}
  #allocation0 [shape = 'u32[]', space=smem, size = 0x4, offset = 0x4, fixed_abs, tag = 'smem constant byte address 0x4 - core index']
  #allocation1 [shape = 'u32[144,128]{1,0:T(1,128)}', space=vmem, size = 0x12000, scoped, tag = 'internal scratch']
  %s0 = inlined_call_operand.vmem [shape: f32[2,8,32], index: 0, kind: input, shape index: {}]
  %s1 = inlined_call_operand.vmem [shape: bf16[16,8], index: 1, kind: input, shape index: {}]
  %s2 = inlined_call_operand.vmem [shape: bf16[64,32], index: 2, kind: input, shape index: {}]
  %s3 = inlined_call_operand.vmem [shape: f32[1,32], index: 3, kind: input, shape index: {}]
  %s4 = inlined_call_operand.vmem [shape: f32[1,32], index: 4, kind: input, shape index: {}]
  %s5 = inlined_call_operand.vmem [shape: bf16[32,64], index: 5, kind: input, shape index: {}]
  %s6 = inlined_call_operand.vmem [shape: f32[1,64], index: 6, kind: input, shape index: {}]
  %s7 = inlined_call_operand.vmem [shape: bf16[64,32], index: 7, kind: input, shape index: {}]
  %s8 = inlined_call_operand.vmem [shape: f32[1,32], index: 8, kind: input, shape index: {}]
  %s9 = inlined_call_operand.vmem [shape: f32[1,32], index: 9, kind: input, shape index: {}]
  %s10 = inlined_call_operand.vmem [shape: f32[1,32], index: 10, kind: input, shape index: {}]
  %s11 = inlined_call_operand.hbm [shape: f32[2,8,32], index: 11, kind: output, shape index: {}]
  %s12 = sld [smem:[#allocation0]]
  $region77: #{_fsf_impl.1} parent=0
    _
  %s14 = ssub.s32 1, %s12
  %s15 = scalar_select 0, %s14, %s12
  $region1: #{_fsf_impl.1} parent=0
    #allocation2 [shape = 'u8[8192]{0}', space=vmem, size = 0x2000, scoped, tag = 'output window, operand 0']
    #allocation3 [shape = 's32[2]{0}', space=sflag, size = 0x8, scoped, tag = 'scoped memory for _fsf_impl.1']
    %16 = vsyncpa [#allocation3], 0
    %s17 = scalar_lea.sflag [#allocation3], 1
    %18 = vsyncpa %s17, 0
    loop: start=0, step=1, limit=4
    $region2: #{_fsf_impl.1} parent=1 // loop_pre_header
      _
    $region3: #{_fsf_impl.1} parent=1 // loop_header
      %s20 = sphi 0, %s24
      %p21 = scmp.ge.s32.totalorder %s20, 4
      %s30 = sphi 0, %s32
      %s33 = sphi 0, %s30
      %s34 = sphi 0, %s33
      %s50 = sphi 0, %s34
      %s54 = sphi 0, %s54
      %s56 = sphi 0, %s54
      %s57 = sphi 0, %s56
      %s71 = sphi 0, %s57
      %s75 = sphi 0, %s75
      %s77 = sphi 0, %s75
      %s78 = sphi 0, %s77
      %s92 = sphi 0, %s78
      %s96 = sphi 0, %s96
      %s98 = sphi 0, %s96
      %s99 = sphi 0, %s98
      %s113 = sphi 0, %s99
      %s117 = sphi 0, %s117
      %s119 = sphi 0, %s117
      %s120 = sphi 0, %s119
      %s134 = sphi 0, %s120
      %s138 = sphi 0, %s138
      %s140 = sphi 0, %s138
      %s141 = sphi 0, %s140
      %s155 = sphi 0, %s141
      %s159 = sphi 0, %s159
      %s161 = sphi 0, %s159
      %s162 = sphi 0, %s161
      %s176 = sphi 0, %s162
      %s180 = sphi 0, %s180
      %s182 = sphi 0, %s180
      %s183 = sphi 0, %s182
      %s197 = sphi 0, %s183
      %s201 = sphi 0, %s201
      %s203 = sphi 0, %s201
      %s204 = sphi 0, %s203
      %s218 = sphi 0, %s204
      %s222 = sphi 0, %s222
      %s224 = sphi 0, %s222
      %s225 = sphi 0, %s224
      %s239 = sphi 0, %s225
      %s243 = sphi 0, %s243
      %s245 = sphi 0, %s243
      %s246 = sphi 0, %s245
      %s260 = sphi 0, %s246
      %s266 = sphi 0, %s268
      %s269 = sphi 0, %s266
      %s270 = sphi 0, %s269
      %s286 = sphi 0, %s270
    $region4: #{_fsf_impl.1} parent=1 // loop_header_branch
      %23 = sbr.rel (%p21) target = $region8
    $region5: #{_fsf_impl.1} parent=1 // loop_body
      %s25 = ssub.s32 %s20, 1
      %s26 = ssub.s32 %s20, 2
      %s27 = sadd.s32 %s20, 1
      %s28 = ssub.s32 %s20, %s27
      %p29 = scmp.eq.s32.totalorder %s28, 0
      %s31 = sadd.s32 %s30, 1
      %s32 = scalar_select %p29, %s30, %s31
      %p35 = pneg %p29
      %p36 = scmp.eq.s32.totalorder %s20, 1
      %p37 = por %p35, %p36
      %p38 = scmp.ne.s32.totalorder %s30, %s33
      %p39 = scmp.eq.s32.totalorder %s20, 0
      %p40 = por %p38, %p39
      %p41 = scmp.ne.s32.totalorder %s30, %s33
      %p42 = scmp.eq.s32.totalorder %s25, 1
      %p43 = por %p41, %p42
      %p44 = scmp.ne.s32.totalorder %s33, %s34
      %p45 = scmp.eq.s32.totalorder %s25, 0
      %p46 = por %p44, %p45
      %p47 = scmp.ne.s32.totalorder %s33, %s34
      %p48 = scmp.eq.s32.totalorder %s26, 1
      %p49 = por %p47, %p48
      %p51 = scmp.ne.s32.totalorder %s34, %s50
      %p52 = scmp.eq.s32.totalorder %s26, 0
      %p53 = por %p51, %p52
      %s55 = sadd.s32 %s54, 1
      %p58 = scmp.eq.s32.totalorder %s20, 1
      %p59 = scmp.ne.s32.totalorder %s54, %s56
      %p60 = scmp.eq.s32.totalorder %s20, 0
      %p61 = por %p59, %p60
      %p62 = scmp.ne.s32.totalorder %s54, %s56
      %p63 = scmp.eq.s32.totalorder %s25, 1
      %p64 = por %p62, %p63
      %p65 = scmp.ne.s32.totalorder %s56, %s57
      %p66 = scmp.eq.s32.totalorder %s25, 0
      %p67 = por %p65, %p66
      %p68 = scmp.ne.s32.totalorder %s56, %s57
      %p69 = scmp.eq.s32.totalorder %s26, 1
      %p70 = por %p68, %p69
      %p72 = scmp.ne.s32.totalorder %s57, %s71
      %p73 = scmp.eq.s32.totalorder %s26, 0
      %p74 = por %p72, %p73
      %s76 = sadd.s32 %s75, 1
      %p79 = scmp.eq.s32.totalorder %s20, 1
      %p80 = scmp.ne.s32.totalorder %s75, %s77
      %p81 = scmp.eq.s32.totalorder %s20, 0
      %p82 = por %p80, %p81
      %p83 = scmp.ne.s32.totalorder %s75, %s77
      %p84 = scmp.eq.s32.totalorder %s25, 1
      %p85 = por %p83, %p84
      %p86 = scmp.ne.s32.totalorder %s77, %s78
      %p87 = scmp.eq.s32.totalorder %s25, 0
      %p88 = por %p86, %p87
      %p89 = scmp.ne.s32.totalorder %s77, %s78
      %p90 = scmp.eq.s32.totalorder %s26, 1
      %p91 = por %p89, %p90
      %p93 = scmp.ne.s32.totalorder %s78, %s92
      %p94 = scmp.eq.s32.totalorder %s26, 0
      %p95 = por %p93, %p94
      %s97 = sadd.s32 %s96, 1
      %p100 = scmp.eq.s32.totalorder %s20, 1
      %p101 = scmp.ne.s32.totalorder %s96, %s98
      %p102 = scmp.eq.s32.totalorder %s20, 0
      %p103 = por %p101, %p102
      %p104 = scmp.ne.s32.totalorder %s96, %s98
      %p105 = scmp.eq.s32.totalorder %s25, 1
      %p106 = por %p104, %p105
      %p107 = scmp.ne.s32.totalorder %s98, %s99
      %p108 = scmp.eq.s32.totalorder %s25, 0
      %p109 = por %p107, %p108
      %p110 = scmp.ne.s32.totalorder %s98, %s99
      %p111 = scmp.eq.s32.totalorder %s26, 1
      %p112 = por %p110, %p111
      %p114 = scmp.ne.s32.totalorder %s99, %s113
      %p115 = scmp.eq.s32.totalorder %s26, 0
      %p116 = por %p114, %p115
      %s118 = sadd.s32 %s117, 1
      %p121 = scmp.eq.s32.totalorder %s20, 1
      %p122 = scmp.ne.s32.totalorder %s117, %s119
      %p123 = scmp.eq.s32.totalorder %s20, 0
      %p124 = por %p122, %p123
      %p125 = scmp.ne.s32.totalorder %s117, %s119
      %p126 = scmp.eq.s32.totalorder %s25, 1
      %p127 = por %p125, %p126
      %p128 = scmp.ne.s32.totalorder %s119, %s120
      %p129 = scmp.eq.s32.totalorder %s25, 0
      %p130 = por %p128, %p129
      %p131 = scmp.ne.s32.totalorder %s119, %s120
      %p132 = scmp.eq.s32.totalorder %s26, 1
      %p133 = por %p131, %p132
      %p135 = scmp.ne.s32.totalorder %s120, %s134
      %p136 = scmp.eq.s32.totalorder %s26, 0
      %p137 = por %p135, %p136
      %s139 = sadd.s32 %s138, 1
      %p142 = scmp.eq.s32.totalorder %s20, 1
      %p143 = scmp.ne.s32.totalorder %s138, %s140
      %p144 = scmp.eq.s32.totalorder %s20, 0
      %p145 = por %p143, %p144
      %p146 = scmp.ne.s32.totalorder %s138, %s140
      %p147 = scmp.eq.s32.totalorder %s25, 1
      %p148 = por %p146, %p147
      %p149 = scmp.ne.s32.totalorder %s140, %s141
      %p150 = scmp.eq.s32.totalorder %s25, 0
      %p151 = por %p149, %p150
      %p152 = scmp.ne.s32.totalorder %s140, %s141
      %p153 = scmp.eq.s32.totalorder %s26, 1
      %p154 = por %p152, %p153
      %p156 = scmp.ne.s32.totalorder %s141, %s155
      %p157 = scmp.eq.s32.totalorder %s26, 0
      %p158 = por %p156, %p157
      %s160 = sadd.s32 %s159, 1
      %p163 = scmp.eq.s32.totalorder %s20, 1
      %p164 = scmp.ne.s32.totalorder %s159, %s161
      %p165 = scmp.eq.s32.totalorder %s20, 0
      %p166 = por %p164, %p165
      %p167 = scmp.ne.s32.totalorder %s159, %s161
      %p168 = scmp.eq.s32.totalorder %s25, 1
      %p169 = por %p167, %p168
      %p170 = scmp.ne.s32.totalorder %s161, %s162
      %p171 = scmp.eq.s32.totalorder %s25, 0
      %p172 = por %p170, %p171
      %p173 = scmp.ne.s32.totalorder %s161, %s162
      %p174 = scmp.eq.s32.totalorder %s26, 1
      %p175 = por %p173, %p174
      %p177 = scmp.ne.s32.totalorder %s162, %s176
      %p178 = scmp.eq.s32.totalorder %s26, 0
      %p179 = por %p177, %p178
      %s181 = sadd.s32 %s180, 1
      %p184 = scmp.eq.s32.totalorder %s20, 1
      %p185 = scmp.ne.s32.totalorder %s180, %s182
      %p186 = scmp.eq.s32.totalorder %s20, 0
      %p187 = por %p185, %p186
      %p188 = scmp.ne.s32.totalorder %s180, %s182
      %p189 = scmp.eq.s32.totalorder %s25, 1
      %p190 = por %p188, %p189
      %p191 = scmp.ne.s32.totalorder %s182, %s183
      %p192 = scmp.eq.s32.totalorder %s25, 0
      %p193 = por %p191, %p192
      %p194 = scmp.ne.s32.totalorder %s182, %s183
      %p195 = scmp.eq.s32.totalorder %s26, 1
      %p196 = por %p194, %p195
      %p198 = scmp.ne.s32.totalorder %s183, %s197
      %p199 = scmp.eq.s32.totalorder %s26, 0
      %p200 = por %p198, %p199
      %s202 = sadd.s32 %s201, 1
      %p205 = scmp.eq.s32.totalorder %s20, 1
      %p206 = scmp.ne.s32.totalorder %s201, %s203
      %p207 = scmp.eq.s32.totalorder %s20, 0
      %p208 = por %p206, %p207
      %p209 = scmp.ne.s32.totalorder %s201, %s203
      %p210 = scmp.eq.s32.totalorder %s25, 1
      %p211 = por %p209, %p210
      %p212 = scmp.ne.s32.totalorder %s203, %s204
      %p213 = scmp.eq.s32.totalorder %s25, 0
      %p214 = por %p212, %p213
      %p215 = scmp.ne.s32.totalorder %s203, %s204
      %p216 = scmp.eq.s32.totalorder %s26, 1
      %p217 = por %p215, %p216
      %p219 = scmp.ne.s32.totalorder %s204, %s218
      %p220 = scmp.eq.s32.totalorder %s26, 0
      %p221 = por %p219, %p220
      %s223 = sadd.s32 %s222, 1
      %p226 = scmp.eq.s32.totalorder %s20, 1
      %p227 = scmp.ne.s32.totalorder %s222, %s224
      %p228 = scmp.eq.s32.totalorder %s20, 0
      %p229 = por %p227, %p228
      %p230 = scmp.ne.s32.totalorder %s222, %s224
      %p231 = scmp.eq.s32.totalorder %s25, 1
      %p232 = por %p230, %p231
      %p233 = scmp.ne.s32.totalorder %s224, %s225
      %p234 = scmp.eq.s32.totalorder %s25, 0
      %p235 = por %p233, %p234
      %p236 = scmp.ne.s32.totalorder %s224, %s225
      %p237 = scmp.eq.s32.totalorder %s26, 1
      %p238 = por %p236, %p237
      %p240 = scmp.ne.s32.totalorder %s225, %s239
      %p241 = scmp.eq.s32.totalorder %s26, 0
      %p242 = por %p240, %p241
      %s244 = sadd.s32 %s243, 1
      %p247 = scmp.eq.s32.totalorder %s20, 1
      %p248 = scmp.ne.s32.totalorder %s243, %s245
      %p249 = scmp.eq.s32.totalorder %s20, 0
      %p250 = por %p248, %p249
      %p251 = scmp.ne.s32.totalorder %s243, %s245
      %p252 = scmp.eq.s32.totalorder %s25, 1
      %p253 = por %p251, %p252
      %p254 = scmp.ne.s32.totalorder %s245, %s246
      %p255 = scmp.eq.s32.totalorder %s25, 0
      %p256 = por %p254, %p255
      %p257 = scmp.ne.s32.totalorder %s245, %s246
      %p258 = scmp.eq.s32.totalorder %s26, 1
      %p259 = por %p257, %p258
      %p261 = scmp.ne.s32.totalorder %s246, %s260
      %p262 = scmp.eq.s32.totalorder %s26, 0
      %p263 = por %p261, %p262
      %s264 = ssub.s32 %s20, %s27
      %p265 = scmp.eq.s32.totalorder %s264, 0
      %s267 = sadd.s32 %s266, 1
      %s268 = scalar_select %p265, %s266, %s267
      %p271 = pneg %p265
      %p272 = scmp.eq.s32.totalorder %s20, 1
      %p273 = por %p271, %p272
      %p274 = scmp.ne.s32.totalorder %s266, %s269
      %p275 = scmp.eq.s32.totalorder %s20, 0
      %p276 = por %p274, %p275
      %p277 = scmp.ne.s32.totalorder %s266, %s269
      %p278 = scmp.eq.s32.totalorder %s25, 1
      %p279 = por %p277, %p278
      %p280 = scmp.ne.s32.totalorder %s269, %s270
      %p281 = scmp.eq.s32.totalorder %s25, 0
      %p282 = por %p280, %p281
      %p283 = scmp.ne.s32.totalorder %s269, %s270
      %p284 = scmp.eq.s32.totalorder %s26, 1
      %p285 = por %p283, %p284
      %p287 = scmp.ne.s32.totalorder %s270, %s286
      %p288 = scmp.eq.s32.totalorder %s26, 0
      %p289 = por %p287, %p288
      %p290 = scmp.le.s32.totalorder 1, %s20
      %p291 = scmp.lt.s32.totalorder %s20, 3
      %p292 = pnand %p290, %p291
      %p293 = pneg %p292
      // Predicated region
      $region9: #{_fsf_impl.1} parent=5 // pred_check
        _
      $region10: #{_fsf_impl.1} parent=5 // pred_check_branch
        %295 = sbr.rel (%p292) target = $region12
      $region11: #{_fsf_impl.1} parent=5 // pred_region
        %s296 = ssub.s32 %s20, 1
        // Predicated region
        $region13: #{_fsf_impl.1} parent=11 // pred_check
          %p297 = pneg %p67
        $region14: #{_fsf_impl.1} parent=11 // pred_check_branch
          %299 = sbr.rel (%p297) target = $region16
        $region15: #{_fsf_impl.1} parent=11 // pred_region
          _
        $region16: #{_fsf_impl.1} parent=11 // pred_fallthru
          _
        // Predicated region
        $region17: #{_fsf_impl.1} parent=11 // pred_check
          %p300 = pneg %p88
        $region18: #{_fsf_impl.1} parent=11 // pred_check_branch
          %302 = sbr.rel (%p300) target = $region20
        $region19: #{_fsf_impl.1} parent=11 // pred_region
          _
        $region20: #{_fsf_impl.1} parent=11 // pred_fallthru
          _
        // Predicated region
        $region21: #{_fsf_impl.1} parent=11 // pred_check
          %p303 = pneg %p109
        $region22: #{_fsf_impl.1} parent=11 // pred_check_branch
          %305 = sbr.rel (%p303) target = $region24
        $region23: #{_fsf_impl.1} parent=11 // pred_region
          _
        $region24: #{_fsf_impl.1} parent=11 // pred_fallthru
          _
        // Predicated region
        $region25: #{_fsf_impl.1} parent=11 // pred_check
          %p306 = pneg %p130
        $region26: #{_fsf_impl.1} parent=11 // pred_check_branch
          %308 = sbr.rel (%p306) target = $region28
        $region27: #{_fsf_impl.1} parent=11 // pred_region
          _
        $region28: #{_fsf_impl.1} parent=11 // pred_fallthru
          _
        // Predicated region
        $region29: #{_fsf_impl.1} parent=11 // pred_check
          %p309 = pneg %p151
        $region30: #{_fsf_impl.1} parent=11 // pred_check_branch
          %311 = sbr.rel (%p309) target = $region32
        $region31: #{_fsf_impl.1} parent=11 // pred_region
          _
        $region32: #{_fsf_impl.1} parent=11 // pred_fallthru
          _
        // Predicated region
        $region33: #{_fsf_impl.1} parent=11 // pred_check
          %p312 = pneg %p172
        $region34: #{_fsf_impl.1} parent=11 // pred_check_branch
          %314 = sbr.rel (%p312) target = $region36
        $region35: #{_fsf_impl.1} parent=11 // pred_region
          _
        $region36: #{_fsf_impl.1} parent=11 // pred_fallthru
          _
        // Predicated region
        $region37: #{_fsf_impl.1} parent=11 // pred_check
          %p315 = pneg %p193
        $region38: #{_fsf_impl.1} parent=11 // pred_check_branch
          %317 = sbr.rel (%p315) target = $region40
        $region39: #{_fsf_impl.1} parent=11 // pred_region
          _
        $region40: #{_fsf_impl.1} parent=11 // pred_fallthru
          _
        // Predicated region
        $region41: #{_fsf_impl.1} parent=11 // pred_check
          %p318 = pneg %p214
        $region42: #{_fsf_impl.1} parent=11 // pred_check_branch
          %320 = sbr.rel (%p318) target = $region44
        $region43: #{_fsf_impl.1} parent=11 // pred_region
          _
        $region44: #{_fsf_impl.1} parent=11 // pred_fallthru
          _
        // Predicated region
        $region45: #{_fsf_impl.1} parent=11 // pred_check
          %p321 = pneg %p235
        $region46: #{_fsf_impl.1} parent=11 // pred_check_branch
          %323 = sbr.rel (%p321) target = $region48
        $region47: #{_fsf_impl.1} parent=11 // pred_region
          _
        $region48: #{_fsf_impl.1} parent=11 // pred_fallthru
          _
        // Predicated region
        $region49: #{_fsf_impl.1} parent=11 // pred_check
          %p324 = pneg %p256
        $region50: #{_fsf_impl.1} parent=11 // pred_check_branch
          %326 = sbr.rel (%p324) target = $region52
        $region51: #{_fsf_impl.1} parent=11 // pred_region
          _
        $region52: #{_fsf_impl.1} parent=11 // pred_fallthru
          _
      $region12: #{_fsf_impl.1} parent=5 // pred_fallthru
        _
      %p327 = scmp.lt.s32.totalorder %s20, 2
      // Predicated region
      $region53: #{_fsf_impl.1} parent=5 // pred_check
        %p328 = pneg %p327
      $region54: #{_fsf_impl.1} parent=5 // pred_check_branch
        %330 = sbr.rel (%p328) target = $region56
      $region55: #{_fsf_impl.1} parent=5 // pred_region
        // Predicated region
        $region57: #{_fsf_impl.1} parent=55 // pred_check
          %p331 = pneg %p40
        $region58: #{_fsf_impl.1} parent=55 // pred_check_branch
          %333 = sbr.rel (%p331) target = $region60
        $region59: #{_fsf_impl.1} parent=55 // pred_region
          %p334 = scmp.lt.s32.totalorder %s20, 1
          %s335 = scalar_select %p334, %s20, 1
          %s336 = smul.addr %s335, 8
          %s337 = scalar_lea.vmem %s0, %s336
        $region60: #{_fsf_impl.1} parent=55 // pred_fallthru
          _
      $region56: #{_fsf_impl.1} parent=5 // pred_fallthru
        _
      %p338 = scmp.le.s32.totalorder 1, %s20
      %p339 = scmp.lt.s32.totalorder %s20, 3
      %p340 = pnand %p338, %p339
      %p341 = pneg %p340
      // Predicated region
      $region61: #{_fsf_impl.1} parent=5 // pred_check
        _
      $region62: #{_fsf_impl.1} parent=5 // pred_check_branch
        %343 = sbr.rel (%p340) target = $region64
      $region63: #{_fsf_impl.1} parent=5 // pred_region
        %s344 = ssub.s32 %s20, 1
        %p345 = scmp.lt.s32.totalorder %s25, 1
        %s346 = scalar_select %p345, %s25, 1
        %s347 = smul.addr %s346, 8
        %s348 = scalar_lea.vmem %s0, %s347
        %p349 = pneg %p46
        %p350 = pneg %p43
        %p351 = pneg %p67
        %p352 = pneg %p64
        %p353 = pneg %p88
        %p354 = pneg %p85
        %p355 = pneg %p109
        %p356 = pneg %p106
        %p357 = pneg %p130
        %p358 = pneg %p127
        %p359 = pneg %p151
        %p360 = pneg %p148
        %p361 = pneg %p172
        %p362 = pneg %p169
        %p363 = pneg %p193
        %p364 = pneg %p190
        %p365 = pneg %p214
        %p366 = pneg %p211
        %p367 = pneg %p235
        %p368 = pneg %p232
        %p369 = pneg %p256
        %p370 = pneg %p253
        %p371 = pneg %p282
        %p372 = pneg %p279
        %s373 = sand.u32 %s269, 1
        %s374 = scalar_lea.sflag [#allocation3], %s373
        %s375 = sand.u32 %s269, 1
        %s376 = smul.addr %s375, 8
        %s377 = scalar_lea.vmem [#allocation2], %s376
        %p378 = scmp.lt.s32.totalorder %s25, 1
        %s379 = scalar_select %p378, %s25, 1
        %s380 = smul.addr %s379, 8
        %s381 = scalar_lea.vmem %s0, %s380
        %v383 = vld [vmem:[%s381] sm:$0xff]
        %v384 = vpack.c.bf16 %v383, %v383
        %v385 = vld [vmem:[%s1] sm:$0xf]
        %v386 = vld [vmem:[%s1 + $0x4] sm:$0xf]
        %v389 = vunpack.c.l.b16 %v385
        %v390 = vunpack.c.l.b16 %v386
        %v391 = vpack.c.b16 %v390, %v389
        %vm392 = vcmask 64512
        %v394 = vsel %vm392, %v391, 0
        %vm396 = vcmask 1043456
        %v398 = vsel %vm396, %v384, 0
        %400 = vmatprep.subr.bf16.mxu0 0
        %401 = vmatpush1.bf16.msra.mxu0 %v398
        %402 = vmatprep.subr.bf16.mxu0 0
        %403 = vmatpush1.bf16.msra.mxu0 0
        %404 = vmatprep.subr.bf16.mxu0 0
        %405 = vmatpush1.bf16.msra.mxu0 0
        %406 = vmatprep.subr.bf16.mxu0 0
        %407 = vmatpush1.bf16.msra.mxu0 0
        %408 = vmatprep.subr.bf16.mxu0 0
        %409 = vmatpush1.bf16.msra.mxu0 0
        %410 = vmatprep.subr.bf16.mxu0 0
        %411 = vmatpush1.bf16.msra.mxu0 0
        %412 = vmatprep.subr.bf16.mxu0 0
        %413 = vmatpush1.bf16.msra.mxu0 0
        %414 = vmatprep.subr.bf16.mxu0 0
        %415 = vmatpush1.bf16.msra.mxu0 0
        %416 = vmatprep.subr.bf16.mxu0 0
        %417 = vmatpush1.bf16.msra.mxu0 0
        %418 = vmatprep.subr.bf16.mxu0 0
        %419 = vmatpush1.bf16.msra.mxu0 0
        %420 = vmatprep.subr.bf16.mxu0 0
        %421 = vmatpush1.bf16.msra.mxu0 0
        %422 = vmatprep.subr.bf16.mxu0 0
        %423 = vmatpush1.bf16.msra.mxu0 0
        %424 = vmatprep.subr.bf16.mxu0 0
        %425 = vmatpush1.bf16.msra.mxu0 0
        %426 = vmatprep.subr.bf16.mxu0 0
        %427 = vmatpush1.bf16.msra.mxu0 0
        %428 = vmatprep.subr.bf16.mxu0 0
        %429 = vmatpush1.bf16.msra.mxu0 0
        %430 = vmatprep.subr.bf16.mxu0 0
        %431 = vmatpush1.bf16.msra.mxu0 0
        %432 = vmatprep.mubr.bf16.mxu0 0
        %433 = vmatmul.mubr.bf16.gmra.mrb[0].mxu0 %v394
        %v434 = vpop.f32.mrb[0].mxu0
        %v435 = vadd.f32 0.0, %v434
        %v436 = vpop.f32.mrb[0].mxu0
        %v437 = vpop.f32.mrb[0].mxu0
        %v438 = vadd.f32 0.0, %v437
        %v439 = vpop.f32.mrb[0].mxu0
        %440 = vdwg.mxu0
        %442 = vrot.lane.b32.xlu0 %v438, 32
        %v443 = vpop.permute.xlu0 %442
        %vm445 = vcmask 261120
        %v446 = vsel %vm445, %v435, %v443
        %v447 = vpack.c.bf16 %v446, %v446
        %v448 = vld [vmem:[%s2] sm:$0xf]
        %v449 = vld [vmem:[%s2 + $0x4] sm:$0xf]
        %v450 = vld [vmem:[%s2 + $0x8] sm:$0xf]
        %v451 = vld [vmem:[%s2 + $0xc] sm:$0xf]
        %v452 = vld [vmem:[%s2 + $0x10] sm:$0xf]
        %v453 = vld [vmem:[%s2 + $0x14] sm:$0xf]
        %v454 = vld [vmem:[%s2 + $0x18] sm:$0xf]
        %v455 = vld [vmem:[%s2 + $0x1c] sm:$0xf]
        %v464 = vunpack.c.l.b16 %v448
        %v465 = vunpack.c.l.b16 %v449
        %v466 = vunpack.c.l.b16 %v450
        %v467 = vunpack.c.l.b16 %v451
        %v468 = vunpack.c.l.b16 %v452
        %v469 = vunpack.c.l.b16 %v453
        %v470 = vunpack.c.l.b16 %v454
        %v471 = vunpack.c.l.b16 %v455
        %v472 = vpack.c.b16 %v465, %v464
        %v473 = vpack.c.b16 %v467, %v466
        %v474 = vpack.c.b16 %v469, %v468
        %v475 = vpack.c.b16 %v471, %v470
        %vm480 = vcmask 523264
        %v482 = vsel %vm480, %v447, 0
        %484 = vmatprep.subr.bf16.mxu0 0
        %485 = vmatpush1.bf16.msra.mxu0 %v472
        %486 = vmatprep.subr.bf16.mxu0 0
        %487 = vmatpush1.bf16.msra.mxu0 %v473
        %488 = vmatprep.subr.bf16.mxu0 0
        %489 = vmatpush1.bf16.msra.mxu0 %v474
        %490 = vmatprep.subr.bf16.mxu0 0
        %491 = vmatpush1.bf16.msra.mxu0 %v475
        %492 = vmatprep.subr.bf16.mxu0 0
        %493 = vmatpush1.bf16.msra.mxu0 0
        %494 = vmatprep.subr.bf16.mxu0 0
        %495 = vmatpush1.bf16.msra.mxu0 0
        %496 = vmatprep.subr.bf16.mxu0 0
        %497 = vmatpush1.bf16.msra.mxu0 0
        %498 = vmatprep.subr.bf16.mxu0 0
        %499 = vmatpush1.bf16.msra.mxu0 0
        %500 = vmatprep.subr.bf16.mxu0 0
        %501 = vmatpush1.bf16.msra.mxu0 0
        %502 = vmatprep.subr.bf16.mxu0 0
        %503 = vmatpush1.bf16.msra.mxu0 0
        %504 = vmatprep.subr.bf16.mxu0 0
        %505 = vmatpush1.bf16.msra.mxu0 0
        %506 = vmatprep.subr.bf16.mxu0 0
        %507 = vmatpush1.bf16.msra.mxu0 0
        %508 = vmatprep.subr.bf16.mxu0 0
        %509 = vmatpush1.bf16.msra.mxu0 0
        %510 = vmatprep.subr.bf16.mxu0 0
        %511 = vmatpush1.bf16.msra.mxu0 0
        %512 = vmatprep.subr.bf16.mxu0 0
        %513 = vmatpush1.bf16.msra.mxu0 0
        %514 = vmatprep.subr.bf16.mxu0 0
        %515 = vmatpush1.bf16.msra.mxu0 0
        %516 = vmatprep.mubr.bf16.mxu0 0
        %517 = vmatmul.mubr.bf16.gmra.mrb[0].mxu0 %v482
        %v518 = vpop.f32.mrb[0].mxu0
        %v519 = vadd.f32 0.0, %v518
        %v520 = vpop.f32.mrb[0].mxu0
        %v521 = vpop.f32.mrb[0].mxu0
        %v522 = vpop.f32.mrb[0].mxu0
        %523 = vdwg.mxu0
        %v524 = vadd.f32 %v383, %v519
        %v525 = vld [vmem:[%s3] sm:$0x1]
        %v526 = vld [vmem:[%s4] sm:$0x1]
        %v527 = vsel %vm445, %v524, 0.0
        %528 = vadd.xlane.f32.xlu0 %v527
        %v529 = vpop.xlane.xlu0 %528
        %v530 = vrcp.pop 32.0
        %v531 = vmul.f32 %v529, %v530
        %v532 = vsub.f32 %v524, %v531
        %v533 = vmul.f32 %v532, %v532
        %v534 = vsel %vm445, %v533, 0.0
        %535 = vadd.xlane.f32.xlu0 %v534
        %v536 = vpop.xlane.xlu0 %535
        %v537 = vrcp.pop 31.0
        %v538 = vmul.f32 %v536, %v537
        %v539 = vrsqrt.pop %v538
        %v540 = vmul.f32 %v538, %v539
        %vm541 = vcmp.eq.f32.partialorder %v538, inf
        %v542 = vsel %vm541, %v538, %v540
        %vm543 = vcmp.eq.f32.partialorder %v538, 0.0
        %v544 = vand.u32 %v538, 2147483648
        %v545 = vsel %vm543, %v544, %v542
        %v546 = vadd.f32 %v545, 1e-06
        %v547 = vrcp.pop %v546
        %v549 = vlaneseq
        %v550 = vshrl.u32 %v549, 7
        %v551 = vsub.s32 0, %v550
        %v552 = vrot.slane %v525, %v551
        %v554 = vmul.f32 %v552, %v532
        %v555 = vmul.f32 %v554, %v547
        %v557 = vlaneseq
        %v558 = vshrl.u32 %v557, 7
        %v559 = vsub.s32 0, %v558
        %v560 = vrot.slane %v526, %v559
        %v562 = vadd.f32 %v555, %v560
        %v563 = vpack.c.bf16 %v562, %v562
        %v564 = vld [vmem:[%s5] sm:$0xf]
        %v565 = vld [vmem:[%s5 + $0x4] sm:$0xf]
        %v566 = vld [vmem:[%s5 + $0x8] sm:$0xf]
        %v567 = vld [vmem:[%s5 + $0xc] sm:$0xf]
        %v568 = vld [vmem:[%s6] sm:$0x1]
        %v570 = vlaneseq
        %v571 = vshrl.u32 %v570, 7
        %v572 = vsub.s32 0, %v571
        %v573 = vrot.slane %v568, %v572
        %v579 = vunpack.c.l.b16 %v564
        %v580 = vunpack.c.l.b16 %v565
        %v581 = vunpack.c.l.b16 %v566
        %v582 = vunpack.c.l.b16 %v567
        %v583 = vpack.c.b16 %v580, %v579
        %v584 = vpack.c.b16 %v582, %v581
        %v588 = vsel %vm445, %v563, 0
        %590 = vmatprep.subr.bf16.mxu0 0
        %591 = vmatpush1.bf16.msra.mxu0 %v583
        %592 = vmatprep.subr.bf16.mxu0 0
        %593 = vmatpush1.bf16.msra.mxu0 %v584
        %594 = vmatprep.subr.bf16.mxu0 0
        %595 = vmatpush1.bf16.msra.mxu0 0
        %596 = vmatprep.subr.bf16.mxu0 0
        %597 = vmatpush1.bf16.msra.mxu0 0
        %598 = vmatprep.subr.bf16.mxu0 0
        %599 = vmatpush1.bf16.msra.mxu0 0
        %600 = vmatprep.subr.bf16.mxu0 0
        %601 = vmatpush1.bf16.msra.mxu0 0
        %602 = vmatprep.subr.bf16.mxu0 0
        %603 = vmatpush1.bf16.msra.mxu0 0
        %604 = vmatprep.subr.bf16.mxu0 0
        %605 = vmatpush1.bf16.msra.mxu0 0
        %606 = vmatprep.subr.bf16.mxu0 0
        %607 = vmatpush1.bf16.msra.mxu0 0
        %608 = vmatprep.subr.bf16.mxu0 0
        %609 = vmatpush1.bf16.msra.mxu0 0
        %610 = vmatprep.subr.bf16.mxu0 0
        %611 = vmatpush1.bf16.msra.mxu0 0
        %612 = vmatprep.subr.bf16.mxu0 0
        %613 = vmatpush1.bf16.msra.mxu0 0
        %614 = vmatprep.subr.bf16.mxu0 0
        %615 = vmatpush1.bf16.msra.mxu0 0
        %616 = vmatprep.subr.bf16.mxu0 0
        %617 = vmatpush1.bf16.msra.mxu0 0
        %618 = vmatprep.subr.bf16.mxu0 0
        %619 = vmatpush1.bf16.msra.mxu0 0
        %620 = vmatprep.subr.bf16.mxu0 0
        %621 = vmatpush1.bf16.msra.mxu0 0
        %622 = vmatprep.mubr.bf16.mxu0 0
        %623 = vmatmul.mubr.bf16.gmra.mrb[0].mxu0 %v588
        %v624 = vpop.f32.mrb[0].mxu0
        %v625 = vadd.f32 %v573, %v624
        %v626 = vpop.f32.mrb[0].mxu0
        %v627 = vpop.f32.mrb[0].mxu0
        %v628 = vpop.f32.mrb[0].mxu0
        %629 = vdwg.mxu0
        %v630 = vmax.f32 %v625, 0.0
        %v631 = vpack.c.bf16 %v630, %v630
        %v632 = vld [vmem:[%s7] sm:$0xf]
        %v633 = vld [vmem:[%s7 + $0x4] sm:$0xf]
        %v634 = vld [vmem:[%s7 + $0x8] sm:$0xf]
        %v635 = vld [vmem:[%s7 + $0xc] sm:$0xf]
        %v636 = vld [vmem:[%s7 + $0x10] sm:$0xf]
        %v637 = vld [vmem:[%s7 + $0x14] sm:$0xf]
        %v638 = vld [vmem:[%s7 + $0x18] sm:$0xf]
        %v639 = vld [vmem:[%s7 + $0x1c] sm:$0xf]
        %v640 = vld [vmem:[%s8] sm:$0x1]
        %v642 = vlaneseq
        %v643 = vshrl.u32 %v642, 7
        %v644 = vsub.s32 0, %v643
        %v645 = vrot.slane %v640, %v644
        %v655 = vunpack.c.l.b16 %v632
        %v656 = vunpack.c.l.b16 %v633
        %v657 = vunpack.c.l.b16 %v634
        %v658 = vunpack.c.l.b16 %v635
        %v659 = vunpack.c.l.b16 %v636
        %v660 = vunpack.c.l.b16 %v637
        %v661 = vunpack.c.l.b16 %v638
        %v662 = vunpack.c.l.b16 %v639
        %v663 = vpack.c.b16 %v656, %v655
        %v664 = vpack.c.b16 %v658, %v657
        %v665 = vpack.c.b16 %v660, %v659
        %v666 = vpack.c.b16 %v662, %v661
        %v672 = vsel %vm480, %v631, 0
        %674 = vmatprep.subr.bf16.mxu0 0
        %675 = vmatpush1.bf16.msra.mxu0 %v663
        %676 = vmatprep.subr.bf16.mxu0 0
        %677 = vmatpush1.bf16.msra.mxu0 %v664
        %678 = vmatprep.subr.bf16.mxu0 0
        %679 = vmatpush1.bf16.msra.mxu0 %v665
        %680 = vmatprep.subr.bf16.mxu0 0
        %681 = vmatpush1.bf16.msra.mxu0 %v666
        %682 = vmatprep.subr.bf16.mxu0 0
        %683 = vmatpush1.bf16.msra.mxu0 0
        %684 = vmatprep.subr.bf16.mxu0 0
        %685 = vmatpush1.bf16.msra.mxu0 0
        %686 = vmatprep.subr.bf16.mxu0 0
        %687 = vmatpush1.bf16.msra.mxu0 0
        %688 = vmatprep.subr.bf16.mxu0 0
        %689 = vmatpush1.bf16.msra.mxu0 0
        %690 = vmatprep.subr.bf16.mxu0 0
        %691 = vmatpush1.bf16.msra.mxu0 0
        %692 = vmatprep.subr.bf16.mxu0 0
        %693 = vmatpush1.bf16.msra.mxu0 0
        %694 = vmatprep.subr.bf16.mxu0 0
        %695 = vmatpush1.bf16.msra.mxu0 0
        %696 = vmatprep.subr.bf16.mxu0 0
        %697 = vmatpush1.bf16.msra.mxu0 0
        %698 = vmatprep.subr.bf16.mxu0 0
        %699 = vmatpush1.bf16.msra.mxu0 0
        %700 = vmatprep.subr.bf16.mxu0 0
        %701 = vmatpush1.bf16.msra.mxu0 0
        %702 = vmatprep.subr.bf16.mxu0 0
        %703 = vmatpush1.bf16.msra.mxu0 0
        %704 = vmatprep.subr.bf16.mxu0 0
        %705 = vmatpush1.bf16.msra.mxu0 0
        %706 = vmatprep.mubr.bf16.mxu0 0
        %707 = vmatmul.mubr.bf16.gmra.mrb[0].mxu0 %v672
        %v708 = vpop.f32.mrb[0].mxu0
        %v709 = vadd.f32 %v645, %v708
        %v710 = vpop.f32.mrb[0].mxu0
        %v711 = vpop.f32.mrb[0].mxu0
        %v712 = vpop.f32.mrb[0].mxu0
        %713 = vdwg.mxu0
        %v714 = vadd.f32 %v562, %v709
        %v715 = vld [vmem:[%s9] sm:$0x1]
        %v716 = vld [vmem:[%s10] sm:$0x1]
        %v717 = vsel %vm445, %v714, 0.0
        %718 = vadd.xlane.f32.xlu0 %v717
        %v719 = vpop.xlane.xlu0 %718
        %v720 = vmul.f32 %v719, %v530
        %v721 = vsub.f32 %v714, %v720
        %v722 = vmul.f32 %v721, %v721
        %v723 = vsel %vm445, %v722, 0.0
        %724 = vadd.xlane.f32.xlu0 %v723
        %v725 = vpop.xlane.xlu0 %724
        %v726 = vmul.f32 %v725, %v537
        %v727 = vrsqrt.pop %v726
        %v728 = vmul.f32 %v726, %v727
        %vm729 = vcmp.eq.f32.partialorder %v726, inf
        %v730 = vsel %vm729, %v726, %v728
        %vm731 = vcmp.eq.f32.partialorder %v726, 0.0
        %v732 = vand.u32 %v726, 2147483648
        %v733 = vsel %vm731, %v732, %v730
        %v734 = vadd.f32 %v733, 1e-06
        %v735 = vrcp.pop %v734
        %v737 = vlaneseq
        %v738 = vshrl.u32 %v737, 7
        %v739 = vsub.s32 0, %v738
        %v740 = vrot.slane %v715, %v739
        %v742 = vmul.f32 %v740, %v721
        %v743 = vmul.f32 %v742, %v735
        %v745 = vlaneseq
        %v746 = vshrl.u32 %v745, 7
        %v747 = vsub.s32 0, %v746
        %v748 = vrot.slane %v716, %v747
        %v750 = vadd.f32 %v743, %v748
        %751 = vst.msk [vmem:[%s377] sm:$0xff] %vm445, %v750
        %s752 = sand.u32 %s269, 1
        %s753 = scalar_lea.sflag [#allocation3], %s752
        %s754 = sand.u32 %s269, 1
        %s755 = smul.addr %s754, 8
        %s756 = scalar_lea.vmem [#allocation2], %s755
        // Predicated region
        $region65: #{_fsf_impl.1} parent=63 // pred_check
          %p757 = pneg %p279
        $region66: #{_fsf_impl.1} parent=63 // pred_check_branch
          %759 = sbr.rel (%p757) target = $region68
        $region67: #{_fsf_impl.1} parent=63 // pred_region
          %s761 = ssub.s32 128, 128
          %762 = vsyncadd %s753, %s761
          %s763 = smul.addr %s25, 128
          %s764 = scalar_lea.hbm %s11, %s763
          %s766 = sshll.u32 %s756, 4
          %s767 = int_to_ptr.vmem [resolvable:$true] %s766
          %769 = dma.vmem_to_hbm [thread:$0]  %s767, 128, %s764, %s753
        $region68: #{_fsf_impl.1} parent=63 // pred_fallthru
          _
      $region64: #{_fsf_impl.1} parent=5 // pred_fallthru
        _
      %p770 = scmp.le.s32.totalorder 2, %s20
      // Predicated region
      $region69: #{_fsf_impl.1} parent=5 // pred_check
        %p771 = pneg %p770
      $region70: #{_fsf_impl.1} parent=5 // pred_check_branch
        %773 = sbr.rel (%p771) target = $region72
      $region71: #{_fsf_impl.1} parent=5 // pred_region
        %s774 = ssub.s32 %s20, 2
        // Predicated region
        $region73: #{_fsf_impl.1} parent=71 // pred_check
          %p775 = pneg %p285
        $region74: #{_fsf_impl.1} parent=71 // pred_check_branch
          %777 = sbr.rel (%p775) target = $region76
        $region75: #{_fsf_impl.1} parent=71 // pred_region
          %s778 = sand.u32 %s270, 1
          %s779 = scalar_lea.sflag [#allocation3], %s778
          %s780 = sand.u32 %s270, 1
          %s781 = smul.addr %s780, 8
          %s782 = scalar_lea.vmem [#allocation2], %s781
          %783 = dma.done %s779, 128
        $region76: #{_fsf_impl.1} parent=71 // pred_fallthru
          _
      $region72: #{_fsf_impl.1} parent=5 // pred_fallthru
        _
    $region6: #{_fsf_impl.1} parent=1 // loop_footer
      %s24 = sadd.s32 1, %s20
    $region7: #{_fsf_impl.1} parent=1 // loop_footer_branch
      %19 = sbr.rel target = $region3
    $region8: #{_fsf_impl.1} parent=1 // loop_exit
      _
    %784 = vsyncpa [#allocation3], 1
    %s785 = scalar_lea.sflag [#allocation3], 1
    %786 = vsyncpa %s785, 1

</llo_original>
